<compile_context>
chip_gen: v6e
topology: v6e:2x2x1
jax: 0.10.0
libtpu: 0.0.40
codegen_flags: <defaults>
</compile_context>

<pallas_src>
import functools
import math

import jax
import jax.numpy as jnp
from jax import lax
from jax.experimental import pallas as pl
from jax.experimental.pallas import tpu as pltpu


# --------------------------- Kernel 1: fused QKV projection ---------------------------

def qkv_proj_kernel(x_ref, pos_ref, wqk_ref, bqk_ref, wv_ref, bv_ref,
                    q_ref, k_ref, v_ref, *, d_model, nhead, dh, scale):
    x = x_ref[0].astype(jnp.float32)                       # (TS, D) residual stream
    p = pos_ref[0].astype(jnp.float32)                     # (TS, D) pos embed (bf16 in HBM)
    x_bf = x.astype(jnp.bfloat16)
    xp_bf = (x + p).astype(jnp.bfloat16)                   # with_pos_embed(src, pos)

    # Fused q|k projection (one MXU call, 2*D output columns); v from x alone.
    qk = jnp.dot(xp_bf, wqk_ref[...], preferred_element_type=jnp.float32) + bqk_ref[...]
    vv = jnp.dot(x_bf, wv_ref[...], preferred_element_type=jnp.float32) + bv_ref[...]

    q_all = qk[:, :d_model] * scale                        # fold 1/sqrt(dh) into q once
    k_all = qk[:, d_model:]

    # Static per-head stores -> head-major (B, H, S, dh) outputs, no XLA transpose.
    for h in range(nhead):
        sl = slice(h * dh, (h + 1) * dh)
        q_ref[0, h] = q_all[:, sl].astype(q_ref.dtype)
        k_ref[0, h] = k_all[:, sl].astype(k_ref.dtype)
        v_ref[0, h] = vv[:, sl].astype(v_ref.dtype)


# ---------------- Kernel 2: head-batched attention + residual/LN + FFN ----------------

def attn_ffn_kernel(x_ref, q_ref, k_ref, v_ref, wo_ref, bo_ref,
                    g1_ref, b1n_ref, w1_ref, b1_ref, w2_ref, b2_ref,
                    g2_ref, b2n_ref, out_ref, omerge_ref, *,
                    eps, valid_len, nhead, dh):
    x = x_ref[0].astype(jnp.float32)                       # (TQ, D) residual input
    q = q_ref[0]                                           # (H, TQ, dh) bf16, pre-scaled
    k = k_ref[0]                                           # (H, S,  dh) bf16
    v = v_ref[0]                                           # (H, S,  dh) bf16

    # Head-batched scores on the MXU.
    s = jnp.einsum("hqd,hkd->hqk", q, k,
                   preferred_element_type=jnp.float32)     # (H, TQ, S), f32
    if valid_len < s.shape[-1]:                            # static: mask padded key cols
        col = lax.broadcasted_iota(jnp.int32, s.shape, 2)
        s = jnp.where(col < valid_len, s, -1e30)

    m = jnp.max(s, axis=-1, keepdims=True)
    p = jnp.exp(s - m)                                     # unnormalized probs (<= 1)
    denom = jnp.sum(p, axis=-1, keepdims=True)             # (H, TQ, 1)

    o = jnp.einsum("hqk,hkd->hqd", p.astype(jnp.bfloat16), v,
                   preferred_element_type=jnp.float32)     # (H, TQ, dh)
    # Deferred softmax normalization on the small (H, TQ, dh) tensor (not (H,TQ,S)).
    o = o * pl.reciprocal(denom, approx=True)

    # Merge heads into a lane-dense (TQ, D) slab (cheap masked lane-offset stores),
    # then one full-depth K = D output-projection matmul on the MXU.
    for h in range(nhead):
        omerge_ref[:, h * dh:(h + 1) * dh] = o[h]
    attn = jnp.dot(omerge_ref[...].astype(jnp.bfloat16), wo_ref[...],
                   preferred_element_type=jnp.float32) + bo_ref[...]   # (TQ, D)

    # residual + LayerNorm1 (f32 elementwise; dropout == identity in eval mode)
    x1 = x + attn
    mu = jnp.mean(x1, axis=-1, keepdims=True)
    var = jnp.mean((x1 - mu) ** 2, axis=-1, keepdims=True)
    xn = (x1 - mu) * lax.rsqrt(var + eps) * g1_ref[...] + b1n_ref[...]

    # FFN: linear1 -> ReLU -> linear2 (bf16 MXU operands, f32 accumulate)
    h1 = jnp.dot(xn.astype(jnp.bfloat16), w1_ref[...],
                 preferred_element_type=jnp.float32) + b1_ref[...]
    h1 = jnp.maximum(h1, 0.0)
    ff = jnp.dot(h1.astype(jnp.bfloat16), w2_ref[...],
                 preferred_element_type=jnp.float32) + b2_ref[...]

    # residual + LayerNorm2
    x2 = xn + ff
    mu2 = jnp.mean(x2, axis=-1, keepdims=True)
    var2 = jnp.mean((x2 - mu2) ** 2, axis=-1, keepdims=True)
    out = (x2 - mu2) * lax.rsqrt(var2 + eps) * g2_ref[...] + b2n_ref[...]

    out_ref[0] = out.astype(out_ref.dtype)


# ------------------------------------ helpers ------------------------------------

def _choose_query_tile(S):
    """Query-tile length; the wrapper pads S up to a multiple of it."""
    if S >= 128:
        return 128
    return max(8, -(-S // 8) * 8)       # whole (8-aligned) sequence as a single tile


def _physical_vmem_bytes():
    try:
        info = pltpu.get_tpu_info()
        for attr in ("vmem_capacity_bytes", "vmem_size_bytes", "vmem_bytes"):
            v = getattr(info, attr, None)
            if v:
                return int(v)
    except Exception:
        pass
    return 64 << 20                     # conservative fallback: v7x per-core VMEM


def _vmem_limit_bytes(working_set_bytes):
    phys = _physical_vmem_bytes()
    cap = (phys * 3) // 4               # headroom below physical VMEM (gen-dependent)
    est = 2 * int(working_set_bytes) + (8 << 20)
    return int(min(max(est, 32 << 20), cap))


def _weight_spec(arr):
    n = arr.ndim
    return pl.BlockSpec(arr.shape, lambda b, t, _n=n: (0,) * _n)


def _bytes(*arrays):
    return sum(int(a.size) * a.dtype.itemsize for a in arrays)


def _padded_lane_bytes(shape, itemsize):
    # last dim padded to a 128-lane multiple in VMEM (dh < 128 blocks)
    *lead, last = shape
    last = -(-last // 128) * 128
    n = 1
    for d in lead:
        n *= d
    return n * last * itemsize


# ------------------------------------ wrappers ------------------------------------

def encoder_layer_pallas(x_bsd, pos_bsd_bf16, params, *, nhead, valid_len, tile, eps=1e-5):
    """One post-norm encoder layer on (B, S_pad, D) inputs (S_pad multiple of tile)."""
    B, S, D = x_bsd.shape
    assert D % nhead == 0
    dh = D // nhead
    scale = 1.0 / math.sqrt(dh)
    bf16 = jnp.bfloat16
    f32 = jnp.float32
    n_tiles = S // tile
    FF = params["w1"].shape[1]

    # ---- split / cast weights once (plain XLA ops outside the kernels) ----
    w_qk = params["wqkv"][:, :2 * D].astype(bf16)           # (D, 2D)
    w_v = params["wqkv"][:, 2 * D:].astype(bf16)             # (D, D)
    b_qk = params["bqkv"][:, :2 * D].astype(f32)              # (1, 2D)
    b_v = params["bqkv"][:, 2 * D:].astype(f32)               # (1, D)
    wo = params["wo"].astype(bf16)                            # (D, D)
    bo = params["bo"].astype(f32)
    g1 = params["g1"].astype(f32)
    b1n = params["b1n"].astype(f32)
    w1 = params["w1"].astype(bf16)                            # (D, FF)
    b1f = params["b1"].astype(f32)                            # (1, FF)
    w2 = params["w2"].astype(bf16)                            # (FF, D)
    b2 = params["b2"].astype(f32)
    g2 = params["g2"].astype(f32)
    b2n = params["b2n"].astype(f32)

    # ------------------------- kernel 1: QKV projection -------------------------
    x_spec = pl.BlockSpec((1, tile, D), lambda b, t: (b, t, 0))
    head_spec = pl.BlockSpec((1, nhead, tile, dh), lambda b, t: (b, 0, t, 0))
    qkv_w = [w_qk, b_qk, w_v, b_v]

    blk1 = (2 * (tile * D * 4 + tile * D * 2)                       # x (f32) + pos (bf16)
            + 2 * 3 * _padded_lane_bytes((nhead, tile, dh), 2)       # q/k/v out blocks
            + 4 * tile * D * 4                                        # f32 temporaries
            + 2 * _bytes(*qkv_w))
    cost1 = pl.CostEstimate(
        flops=int(2 * B * S * D * 3 * D),
        transcendentals=0,
        bytes_accessed=int(B * S * D * (4 + 2) + 3 * B * S * D * 2 + _bytes(*qkv_w)))

    q, k, v = pl.pallas_call(
        functools.partial(qkv_proj_kernel, d_model=D, nhead=nhead, dh=dh, scale=scale),
        out_shape=(jax.ShapeDtypeStruct((B, nhead, S, dh), bf16),) * 3,
        grid=(B, n_tiles),
        in_specs=[x_spec, x_spec] + [_weight_spec(w) for w in qkv_w],
        out_specs=(head_spec, head_spec, head_spec),
        compiler_params=pltpu.CompilerParams(
            dimension_semantics=("parallel", "parallel"),
            vmem_limit_bytes=_vmem_limit_bytes(blk1)),
        cost_estimate=cost1,
    )(x_bsd, pos_bsd_bf16, *qkv_w)

    # -------------------- kernel 2: attention + LN + FFN + LN --------------------
    q_spec = pl.BlockSpec((1, nhead, tile, dh), lambda b, t: (b, 0, t, 0))
    kv_spec = pl.BlockSpec((1, nhead, S, dh), lambda b, t: (b, 0, 0, 0))
    out_spec = pl.BlockSpec((1, tile, D), lambda b, t: (b, t, 0))

    w_list = [wo, bo, g1, b1n, w1, b1f, w2, b2, g2, b2n]

    blk2 = (2 * 2 * tile * D * 4                                      # x in / out blocks
            + 2 * _padded_lane_bytes((nhead, tile, dh), 2)             # q block
            + 2 * 2 * _padded_lane_bytes((nhead, S, dh), 2)            # k, v blocks
            + 2 * nhead * tile * S * 4                                  # scores + probs
            + _padded_lane_bytes((nhead, tile, dh), 4)                  # AV output (f32)
            + tile * D * 4                                              # head-merge scratch
            + tile * FF * 4 + 2 * tile * D * 4                          # FFN hidden + LN tmps
            + 2 * _bytes(*w_list))
    cost2 = pl.CostEstimate(
        flops=int(B * (4 * S * S * D + 2 * S * D * D + 4 * S * D * FF)),
        transcendentals=int(B * nhead * S * S),
        bytes_accessed=int(2 * B * S * D * 4
                           + 3 * B * nhead * S * max(dh, 128) * 2
                           + _bytes(*w_list)))

    out = pl.pallas_call(
        functools.partial(attn_ffn_kernel, eps=eps, valid_len=valid_len,
                          nhead=nhead, dh=dh),
        out_shape=jax.ShapeDtypeStruct((B, S, D), x_bsd.dtype),
        grid=(B, n_tiles),
        in_specs=[x_spec, q_spec, kv_spec, kv_spec] + [_weight_spec(w) for w in w_list],
        out_specs=out_spec,
        scratch_shapes=[pltpu.VMEM((tile, D), jnp.float32)],
        compiler_params=pltpu.CompilerParams(
            dimension_semantics=("parallel", "parallel"),
            vmem_limit_bytes=_vmem_limit_bytes(blk2)),
        cost_estimate=cost2,
    )(x_bsd, q, k, v, *w_list)
    return out


def transformer_encoder(src_sbd, pos_sbd, layer_params_list, *, nhead, eps=1e-5):
    """src_sbd, pos_sbd: (S, B, D) as in PyTorch nn.TransformerEncoder. Returns (S, B, D)."""
    S, B, D = src_sbd.shape
    x = jnp.transpose(src_sbd, (1, 0, 2)).astype(jnp.float32)      # residual stream, f32
    pos = jnp.transpose(pos_sbd, (1, 0, 2)).astype(jnp.bfloat16)   # cast once (bf16 MXU operand)

    tile = _choose_query_tile(S)
    s_pad = -(-S // tile) * tile
    if s_pad != S:
        pad = ((0, 0), (0, s_pad - S), (0, 0))
        x = jnp.pad(x, pad)
        pos = jnp.pad(pos, pad)

    for params in layer_params_list:
        x = encoder_layer_pallas(x, pos, params, nhead=nhead, valid_len=S,
                                 tile=tile, eps=eps)

    if s_pad != S:
        x = x[:, :S, :]
    # TransformerEncoder's optional final `norm` is None (DETR post-norm encoder).
    return jnp.transpose(x, (1, 0, 2)).astype(src_sbd.dtype)


# ----------------------------- params / pure-JAX reference -----------------------------

def init_layer_params(key, d_model, nhead, dim_ff):
    ks = jax.random.split(key, 8)
    s = 0.05
    f32 = jnp.float32
    return dict(
        wqkv=jax.random.normal(ks[0], (d_model, 3 * d_model), f32) * s,
        bqkv=jax.random.normal(ks[1], (1, 3 * d_model), f32) * s,
        wo=jax.random.normal(ks[2], (d_model, d_model), f32) * s,
        bo=jax.random.normal(ks[3], (1, d_model), f32) * s,
        g1=jnp.ones((1, d_model), f32),
        b1n=jnp.zeros((1, d_model), f32),
        w1=jax.random.normal(ks[4], (d_model, dim_ff), f32) * s,
        b1=jax.random.normal(ks[5], (1, dim_ff), f32) * s,
        w2=jax.random.normal(ks[6], (dim_ff, d_model), f32) * s,
        b2=jax.random.normal(ks[7], (1, d_model), f32) * s,
        g2=jnp.ones((1, d_model), f32),
        b2n=jnp.zeros((1, d_model), f32),
    )


def _layer_norm(x, g, b, eps):
    mu = jnp.mean(x, axis=-1, keepdims=True)
    var = jnp.mean((x - mu) ** 2, axis=-1, keepdims=True)
    return (x - mu) * lax.rsqrt(var + eps) * g + b


def ref_encoder(src_sbd, pos_sbd, layer_params_list, nhead, eps=1e-5):
    x = jnp.transpose(src_sbd, (1, 0, 2))
    pos = jnp.transpose(pos_sbd, (1, 0, 2))
    B, S, D = x.shape
    dh = D // nhead
    scale = 1.0 / math.sqrt(dh)
    for p in layer_params_list:
        qk = x + pos
        q = qk @ p["wqkv"][:, :D] + p["bqkv"][0, :D]
        k = qk @ p["wqkv"][:, D:2 * D] + p["bqkv"][0, D:2 * D]
        v = x @ p["wqkv"][:, 2 * D:] + p["bqkv"][0, 2 * D:]
        q = q.reshape(B, S, nhead, dh)
        k = k.reshape(B, S, nhead, dh)
        v = v.reshape(B, S, nhead, dh)
        s = jnp.einsum('bqhd,bkhd->bhqk', q, k) * scale
        a = jax.nn.softmax(s, axis=-1)
        o = jnp.einsum('bhqk,bkhd->bqhd', a, v).reshape(B, S, D)
        o = o @ p["wo"] + p["bo"][0]
        x1 = _layer_norm(x + o, p["g1"][0], p["b1n"][0], eps)
        h = jnp.maximum(x1 @ p["w1"] + p["b1"][0], 0.0)
        ff = h @ p["w2"] + p["b2"][0]
        x = _layer_norm(x1 + ff, p["g2"][0], p["b2n"][0], eps)
    return jnp.transpose(x, (1, 0, 2))


if __name__ == "__main__":
    D, H, FF, L, B = 32, 4, 64, 2, 2

    key = jax.random.PRNGKey(0)
    k_src, k_pos, k_par = jax.random.split(key, 3)
    layer_keys = jax.random.split(k_par, L)
    layer_params = [init_layer_params(k, D, H, FF) for k in layer_keys]

    run = jax.jit(functools.partial(transformer_encoder, nhead=H))

    # Case 1: S divisible by 8 (no padding needed).
    S = 8
    src = jax.random.normal(k_src, (S, B, D), jnp.float32)
    pos = jax.random.normal(k_pos, (S, B, D), jnp.float32)
    out = jax.block_until_ready(run(src, pos, layer_params))
    ref = ref_encoder(src, pos, layer_params, H)
    assert out.shape == (S, B, D)
    err = float(jnp.max(jnp.abs(out - ref)))
    # bf16 MXU operands -> compare against the f32 reference with loosened tolerance.
    assert jnp.allclose(out, ref, rtol=3e-2, atol=3e-2), err

    # Case 2: S not divisible by 8 -> exercises the pad + key-mask path (DETR-like S).
    S2 = 10
    src2 = jax.random.normal(jax.random.PRNGKey(1), (S2, B, D), jnp.float32)
    pos2 = jax.random.normal(jax.random.PRNGKey(2), (S2, B, D), jnp.float32)
    out2 = jax.block_until_ready(run(src2, pos2, layer_params))
    ref2 = ref_encoder(src2, pos2, layer_params, H)
    assert out2.shape == (S2, B, D)
    err2 = float(jnp.max(jnp.abs(out2 - ref2)))
    assert jnp.allclose(out2, ref2, rtol=3e-2, atol=3e-2), err2

    print("KERNEL_OK")
</pallas_src>

<mosaic_0001>
module attributes {stable_mosaic.version = 11 : i64} {
  func.func @qkv_proj_kernel(%arg0: i32, %arg1: i32, %arg2: memref<1x8x32xf32, #tpu.memory_space<vmem>>, %arg3: memref<1x8x32xbf16, #tpu.memory_space<vmem>>, %arg4: memref<32x64xbf16, #tpu.memory_space<vmem>>, %arg5: memref<1x64xf32, #tpu.memory_space<vmem>>, %arg6: memref<32x32xbf16, #tpu.memory_space<vmem>>, %arg7: memref<1x32xf32, #tpu.memory_space<vmem>>, %arg8: memref<1x4x8x8xbf16, #tpu.memory_space<vmem>>, %arg9: memref<1x4x8x8xbf16, #tpu.memory_space<vmem>>, %arg10: memref<1x4x8x8xbf16, #tpu.memory_space<vmem>>) attributes {dimension_semantics = [#tpu.dimension_semantics<parallel>, #tpu.dimension_semantics<parallel>], iteration_bounds = array<i64: 2, 1>, scalar_prefetch = 0 : i64, scratch_operands = 0 : i64, tpu.core_type = #tpu.core_type<tc>, window_params = [{transform_indices = @transform_0, window_bounds = array<i64: 1, 8, 32>}, {transform_indices = @transform_1, window_bounds = array<i64: 1, 8, 32>}, {pipeline_mode = #tpu.pipeline_mode<synchronous>, transform_indices = @transform_2, window_bounds = array<i64: 32, 64>}, {pipeline_mode = #tpu.pipeline_mode<synchronous>, transform_indices = @transform_3, window_bounds = array<i64: 1, 64>}, {pipeline_mode = #tpu.pipeline_mode<synchronous>, transform_indices = @transform_4, window_bounds = array<i64: 32, 32>}, {pipeline_mode = #tpu.pipeline_mode<synchronous>, transform_indices = @transform_5, window_bounds = array<i64: 1, 32>}, {transform_indices = @transform_6, window_bounds = array<i64: 1, 4, 8, 8>}, {transform_indices = @transform_7, window_bounds = array<i64: 1, 4, 8, 8>}, {transform_indices = @transform_8, window_bounds = array<i64: 1, 4, 8, 8>}]} {
    %c0 = arith.constant 0 : index
    %c0_0 = arith.constant 0 : index
    %c0_1 = arith.constant 0 : index
    %0 = vector.load %arg2[%c0, %c0_0, %c0_1] : memref<1x8x32xf32, #tpu.memory_space<vmem>>, vector<1x8x32xf32>
    %1 = vector.shape_cast %0 : vector<1x8x32xf32> to vector<8x32xf32>
    %c0_2 = arith.constant 0 : index
    %c0_3 = arith.constant 0 : index
    %c0_4 = arith.constant 0 : index
    %2 = vector.load %arg3[%c0_2, %c0_3, %c0_4] : memref<1x8x32xbf16, #tpu.memory_space<vmem>>, vector<1x8x32xbf16>
    %3 = vector.shape_cast %2 : vector<1x8x32xbf16> to vector<8x32xbf16>
    %4 = arith.extf %3 : vector<8x32xbf16> to vector<8x32xf32>
    %5 = arith.truncf %1 : vector<8x32xf32> to vector<8x32xbf16>
    %6 = arith.addf %1, %4 : vector<8x32xf32>
    %7 = arith.truncf %6 : vector<8x32xf32> to vector<8x32xbf16>
    %c0_5 = arith.constant 0 : index
    %c0_6 = arith.constant 0 : index
    %8 = vector.load %arg4[%c0_5, %c0_6] : memref<32x64xbf16, #tpu.memory_space<vmem>>, vector<32x64xbf16>
    %cst = arith.constant dense<0.000000e+00> : vector<8x64xf32>
    %9 = tpu.matmul %7, %8, %cst {dimension_numbers = #tpu.dot_dimension_numbers<[1], [0], [0], [1], [0, 0, 1, 1], [], []>} : vector<8x32xbf16>, vector<32x64xbf16>, vector<8x64xf32> -> vector<8x64xf32>
    %c0_7 = arith.constant 0 : index
    %c0_8 = arith.constant 0 : index
    %10 = vector.load %arg5[%c0_7, %c0_8] : memref<1x64xf32, #tpu.memory_space<vmem>>, vector<1x64xf32>
    %11 = vector.broadcast %10 : vector<1x64xf32> to vector<8x64xf32>
    %12 = arith.addf %9, %11 : vector<8x64xf32>
    %c0_9 = arith.constant 0 : index
    %c0_10 = arith.constant 0 : index
    %13 = vector.load %arg6[%c0_9, %c0_10] : memref<32x32xbf16, #tpu.memory_space<vmem>>, vector<32x32xbf16>
    %cst_11 = arith.constant dense<0.000000e+00> : vector<8x32xf32>
    %14 = tpu.matmul %5, %13, %cst_11 {dimension_numbers = #tpu.dot_dimension_numbers<[1], [0], [0], [1], [0, 0, 1, 1], [], []>} : vector<8x32xbf16>, vector<32x32xbf16>, vector<8x32xf32> -> vector<8x32xf32>
    %c0_12 = arith.constant 0 : index
    %c0_13 = arith.constant 0 : index
    %15 = vector.load %arg7[%c0_12, %c0_13] : memref<1x32xf32, #tpu.memory_space<vmem>>, vector<1x32xf32>
    %16 = vector.broadcast %15 : vector<1x32xf32> to vector<8x32xf32>
    %17 = arith.addf %14, %16 : vector<8x32xf32>
    %18 = vector.extract_strided_slice %12 {offsets = [0, 0], sizes = [8, 32], strides = [1, 1]} : vector<8x64xf32> to vector<8x32xf32>
    %cst_14 = arith.constant 0.353553385 : f32
    %19 = vector.broadcast %cst_14 : f32 to vector<8x32xf32>
    %20 = arith.mulf %18, %19 : vector<8x32xf32>
    %21 = vector.extract_strided_slice %12 {offsets = [0, 32], sizes = [8, 32], strides = [1, 1]} : vector<8x64xf32> to vector<8x32xf32>
    %22 = vector.extract_strided_slice %20 {offsets = [0, 0], sizes = [8, 8], strides = [1, 1]} : vector<8x32xf32> to vector<8x8xf32>
    %23 = arith.truncf %22 : vector<8x8xf32> to vector<8x8xbf16>
    %c0_15 = arith.constant 0 : index
    %c0_16 = arith.constant 0 : index
    %c0_17 = arith.constant 0 : index
    %c0_18 = arith.constant 0 : index
    %24 = vector.load %arg8[%c0_15, %c0_16, %c0_17, %c0_18] : memref<1x4x8x8xbf16, #tpu.memory_space<vmem>>, vector<1x1x8x8xbf16>
    %25 = vector.shape_cast %24 : vector<1x1x8x8xbf16> to vector<8x8xbf16>
    %26 = vector.shape_cast %23 : vector<8x8xbf16> to vector<1x1x8x8xbf16>
    tpu.vector_store %arg8[%c0_15, %c0_16, %c0_17, %c0_18], %26 {strides = array<i32>} : memref<1x4x8x8xbf16, #tpu.memory_space<vmem>>, vector<1x1x8x8xbf16>,
    %27 = vector.extract_strided_slice %21 {offsets = [0, 0], sizes = [8, 8], strides = [1, 1]} : vector<8x32xf32> to vector<8x8xf32>
    %28 = arith.truncf %27 : vector<8x8xf32> to vector<8x8xbf16>
    %c0_19 = arith.constant 0 : index
    %c0_20 = arith.constant 0 : index
    %c0_21 = arith.constant 0 : index
    %c0_22 = arith.constant 0 : index
    %29 = vector.load %arg9[%c0_19, %c0_20, %c0_21, %c0_22] : memref<1x4x8x8xbf16, #tpu.memory_space<vmem>>, vector<1x1x8x8xbf16>
    %30 = vector.shape_cast %29 : vector<1x1x8x8xbf16> to vector<8x8xbf16>
    %31 = vector.shape_cast %28 : vector<8x8xbf16> to vector<1x1x8x8xbf16>
    tpu.vector_store %arg9[%c0_19, %c0_20, %c0_21, %c0_22], %31 {strides = array<i32>} : memref<1x4x8x8xbf16, #tpu.memory_space<vmem>>, vector<1x1x8x8xbf16>,
    %32 = vector.extract_strided_slice %17 {offsets = [0, 0], sizes = [8, 8], strides = [1, 1]} : vector<8x32xf32> to vector<8x8xf32>
    %33 = arith.truncf %32 : vector<8x8xf32> to vector<8x8xbf16>
    %c0_23 = arith.constant 0 : index
    %c0_24 = arith.constant 0 : index
    %c0_25 = arith.constant 0 : index
    %c0_26 = arith.constant 0 : index
    %34 = vector.load %arg10[%c0_23, %c0_24, %c0_25, %c0_26] : memref<1x4x8x8xbf16, #tpu.memory_space<vmem>>, vector<1x1x8x8xbf16>
    %35 = vector.shape_cast %34 : vector<1x1x8x8xbf16> to vector<8x8xbf16>
    %36 = vector.shape_cast %33 : vector<8x8xbf16> to vector<1x1x8x8xbf16>
    tpu.vector_store %arg10[%c0_23, %c0_24, %c0_25, %c0_26], %36 {strides = array<i32>} : memref<1x4x8x8xbf16, #tpu.memory_space<vmem>>, vector<1x1x8x8xbf16>,
    %37 = vector.extract_strided_slice %20 {offsets = [0, 8], sizes = [8, 8], strides = [1, 1]} : vector<8x32xf32> to vector<8x8xf32>
    %38 = arith.truncf %37 : vector<8x8xf32> to vector<8x8xbf16>
    %c0_27 = arith.constant 0 : index
    %c1 = arith.constant 1 : index
    %c0_28 = arith.constant 0 : index
    %c0_29 = arith.constant 0 : index
    %39 = vector.load %arg8[%c0_27, %c1, %c0_28, %c0_29] : memref<1x4x8x8xbf16, #tpu.memory_space<vmem>>, vector<1x1x8x8xbf16>
    %40 = vector.shape_cast %39 : vector<1x1x8x8xbf16> to vector<8x8xbf16>
    %41 = vector.shape_cast %38 : vector<8x8xbf16> to vector<1x1x8x8xbf16>
    tpu.vector_store %arg8[%c0_27, %c1, %c0_28, %c0_29], %41 {strides = array<i32>} : memref<1x4x8x8xbf16, #tpu.memory_space<vmem>>, vector<1x1x8x8xbf16>,
    %42 = vector.extract_strided_slice %21 {offsets = [0, 8], sizes = [8, 8], strides = [1, 1]} : vector<8x32xf32> to vector<8x8xf32>
    %43 = arith.truncf %42 : vector<8x8xf32> to vector<8x8xbf16>
    %c0_30 = arith.constant 0 : index
    %c1_31 = arith.constant 1 : index
    %c0_32 = arith.constant 0 : index
    %c0_33 = arith.constant 0 : index
    %44 = vector.load %arg9[%c0_30, %c1_31, %c0_32, %c0_33] : memref<1x4x8x8xbf16, #tpu.memory_space<vmem>>, vector<1x1x8x8xbf16>
    %45 = vector.shape_cast %44 : vector<1x1x8x8xbf16> to vector<8x8xbf16>
    %46 = vector.shape_cast %43 : vector<8x8xbf16> to vector<1x1x8x8xbf16>
    tpu.vector_store %arg9[%c0_30, %c1_31, %c0_32, %c0_33], %46 {strides = array<i32>} : memref<1x4x8x8xbf16, #tpu.memory_space<vmem>>, vector<1x1x8x8xbf16>,
    %47 = vector.extract_strided_slice %17 {offsets = [0, 8], sizes = [8, 8], strides = [1, 1]} : vector<8x32xf32> to vector<8x8xf32>
    %48 = arith.truncf %47 : vector<8x8xf32> to vector<8x8xbf16>
    %c0_34 = arith.constant 0 : index
    %c1_35 = arith.constant 1 : index
    %c0_36 = arith.constant 0 : index
    %c0_37 = arith.constant 0 : index
    %49 = vector.load %arg10[%c0_34, %c1_35, %c0_36, %c0_37] : memref<1x4x8x8xbf16, #tpu.memory_space<vmem>>, vector<1x1x8x8xbf16>
    %50 = vector.shape_cast %49 : vector<1x1x8x8xbf16> to vector<8x8xbf16>
    %51 = vector.shape_cast %48 : vector<8x8xbf16> to vector<1x1x8x8xbf16>
    tpu.vector_store %arg10[%c0_34, %c1_35, %c0_36, %c0_37], %51 {strides = array<i32>} : memref<1x4x8x8xbf16, #tpu.memory_space<vmem>>, vector<1x1x8x8xbf16>,
    %52 = vector.extract_strided_slice %20 {offsets = [0, 16], sizes = [8, 8], strides = [1, 1]} : vector<8x32xf32> to vector<8x8xf32>
    %53 = arith.truncf %52 : vector<8x8xf32> to vector<8x8xbf16>
    %c0_38 = arith.constant 0 : index
    %c2 = arith.constant 2 : index
    %c0_39 = arith.constant 0 : index
    %c0_40 = arith.constant 0 : index
    %54 = vector.load %arg8[%c0_38, %c2, %c0_39, %c0_40] : memref<1x4x8x8xbf16, #tpu.memory_space<vmem>>, vector<1x1x8x8xbf16>
    %55 = vector.shape_cast %54 : vector<1x1x8x8xbf16> to vector<8x8xbf16>
    %56 = vector.shape_cast %53 : vector<8x8xbf16> to vector<1x1x8x8xbf16>
    tpu.vector_store %arg8[%c0_38, %c2, %c0_39, %c0_40], %56 {strides = array<i32>} : memref<1x4x8x8xbf16, #tpu.memory_space<vmem>>, vector<1x1x8x8xbf16>,
    %57 = vector.extract_strided_slice %21 {offsets = [0, 16], sizes = [8, 8], strides = [1, 1]} : vector<8x32xf32> to vector<8x8xf32>
    %58 = arith.truncf %57 : vector<8x8xf32> to vector<8x8xbf16>
    %c0_41 = arith.constant 0 : index
    %c2_42 = arith.constant 2 : index
    %c0_43 = arith.constant 0 : index
    %c0_44 = arith.constant 0 : index
    %59 = vector.load %arg9[%c0_41, %c2_42, %c0_43, %c0_44] : memref<1x4x8x8xbf16, #tpu.memory_space<vmem>>, vector<1x1x8x8xbf16>
    %60 = vector.shape_cast %59 : vector<1x1x8x8xbf16> to vector<8x8xbf16>
    %61 = vector.shape_cast %58 : vector<8x8xbf16> to vector<1x1x8x8xbf16>
    tpu.vector_store %arg9[%c0_41, %c2_42, %c0_43, %c0_44], %61 {strides = array<i32>} : memref<1x4x8x8xbf16, #tpu.memory_space<vmem>>, vector<1x1x8x8xbf16>,
    %62 = vector.extract_strided_slice %17 {offsets = [0, 16], sizes = [8, 8], strides = [1, 1]} : vector<8x32xf32> to vector<8x8xf32>
    %63 = arith.truncf %62 : vector<8x8xf32> to vector<8x8xbf16>
    %c0_45 = arith.constant 0 : index
    %c2_46 = arith.constant 2 : index
    %c0_47 = arith.constant 0 : index
    %c0_48 = arith.constant 0 : index
    %64 = vector.load %arg10[%c0_45, %c2_46, %c0_47, %c0_48] : memref<1x4x8x8xbf16, #tpu.memory_space<vmem>>, vector<1x1x8x8xbf16>
    %65 = vector.shape_cast %64 : vector<1x1x8x8xbf16> to vector<8x8xbf16>
    %66 = vector.shape_cast %63 : vector<8x8xbf16> to vector<1x1x8x8xbf16>
    tpu.vector_store %arg10[%c0_45, %c2_46, %c0_47, %c0_48], %66 {strides = array<i32>} : memref<1x4x8x8xbf16, #tpu.memory_space<vmem>>, vector<1x1x8x8xbf16>,
    %67 = vector.extract_strided_slice %20 {offsets = [0, 24], sizes = [8, 8], strides = [1, 1]} : vector<8x32xf32> to vector<8x8xf32>
    %68 = arith.truncf %67 : vector<8x8xf32> to vector<8x8xbf16>
    %c0_49 = arith.constant 0 : index
    %c3 = arith.constant 3 : index
    %c0_50 = arith.constant 0 : index
    %c0_51 = arith.constant 0 : index
    %69 = vector.load %arg8[%c0_49, %c3, %c0_50, %c0_51] : memref<1x4x8x8xbf16, #tpu.memory_space<vmem>>, vector<1x1x8x8xbf16>
    %70 = vector.shape_cast %69 : vector<1x1x8x8xbf16> to vector<8x8xbf16>
    %71 = vector.shape_cast %68 : vector<8x8xbf16> to vector<1x1x8x8xbf16>
    tpu.vector_store %arg8[%c0_49, %c3, %c0_50, %c0_51], %71 {strides = array<i32>} : memref<1x4x8x8xbf16, #tpu.memory_space<vmem>>, vector<1x1x8x8xbf16>,
    %72 = vector.extract_strided_slice %21 {offsets = [0, 24], sizes = [8, 8], strides = [1, 1]} : vector<8x32xf32> to vector<8x8xf32>
    %73 = arith.truncf %72 : vector<8x8xf32> to vector<8x8xbf16>
    %c0_52 = arith.constant 0 : index
    %c3_53 = arith.constant 3 : index
    %c0_54 = arith.constant 0 : index
    %c0_55 = arith.constant 0 : index
    %74 = vector.load %arg9[%c0_52, %c3_53, %c0_54, %c0_55] : memref<1x4x8x8xbf16, #tpu.memory_space<vmem>>, vector<1x1x8x8xbf16>
    %75 = vector.shape_cast %74 : vector<1x1x8x8xbf16> to vector<8x8xbf16>
    %76 = vector.shape_cast %73 : vector<8x8xbf16> to vector<1x1x8x8xbf16>
    tpu.vector_store %arg9[%c0_52, %c3_53, %c0_54, %c0_55], %76 {strides = array<i32>} : memref<1x4x8x8xbf16, #tpu.memory_space<vmem>>, vector<1x1x8x8xbf16>,
    %77 = vector.extract_strided_slice %17 {offsets = [0, 24], sizes = [8, 8], strides = [1, 1]} : vector<8x32xf32> to vector<8x8xf32>
    %78 = arith.truncf %77 : vector<8x8xf32> to vector<8x8xbf16>
    %c0_56 = arith.constant 0 : index
    %c3_57 = arith.constant 3 : index
    %c0_58 = arith.constant 0 : index
    %c0_59 = arith.constant 0 : index
    %79 = vector.load %arg10[%c0_56, %c3_57, %c0_58, %c0_59] : memref<1x4x8x8xbf16, #tpu.memory_space<vmem>>, vector<1x1x8x8xbf16>
    %80 = vector.shape_cast %79 : vector<1x1x8x8xbf16> to vector<8x8xbf16>
    %81 = vector.shape_cast %78 : vector<8x8xbf16> to vector<1x1x8x8xbf16>
    tpu.vector_store %arg10[%c0_56, %c3_57, %c0_58, %c0_59], %81 {strides = array<i32>} : memref<1x4x8x8xbf16, #tpu.memory_space<vmem>>, vector<1x1x8x8xbf16>,
    return
  }
  func.func @transform_0(%arg0: i32, %arg1: i32) -> (i32, i32, i32) {
    %c0_i32 = arith.constant 0 : i32
    %c0_i32_0 = arith.constant 0 : i32
    return %arg0, %arg1, %c0_i32 : i32, i32, i32
  }
  func.func @transform_1(%arg0: i32, %arg1: i32) -> (i32, i32, i32) {
    %c0_i32 = arith.constant 0 : i32
    %c0_i32_0 = arith.constant 0 : i32
    return %arg0, %arg1, %c0_i32 : i32, i32, i32
  }
  func.func @transform_2(%arg0: i32, %arg1: i32) -> (i32, i32) {
    %c0_i32 = arith.constant 0 : i32
    %c0_i32_0 = arith.constant 0 : i32
    %c0_i32_1 = arith.constant 0 : i32
    return %c0_i32, %c0_i32_0 : i32, i32
  }
  func.func @transform_3(%arg0: i32, %arg1: i32) -> (i32, i32) {
    %c0_i32 = arith.constant 0 : i32
    %c0_i32_0 = arith.constant 0 : i32
    %c0_i32_1 = arith.constant 0 : i32
    return %c0_i32, %c0_i32_0 : i32, i32
  }
  func.func @transform_4(%arg0: i32, %arg1: i32) -> (i32, i32) {
    %c0_i32 = arith.constant 0 : i32
    %c0_i32_0 = arith.constant 0 : i32
    %c0_i32_1 = arith.constant 0 : i32
    return %c0_i32, %c0_i32_0 : i32, i32
  }
  func.func @transform_5(%arg0: i32, %arg1: i32) -> (i32, i32) {
    %c0_i32 = arith.constant 0 : i32
    %c0_i32_0 = arith.constant 0 : i32
    %c0_i32_1 = arith.constant 0 : i32
    return %c0_i32, %c0_i32_0 : i32, i32
  }
  func.func @transform_6(%arg0: i32, %arg1: i32) -> (i32, i32, i32, i32) {
    %c0_i32 = arith.constant 0 : i32
    %c0_i32_0 = arith.constant 0 : i32
    %c0_i32_1 = arith.constant 0 : i32
    return %arg0, %c0_i32, %arg1, %c0_i32_0 : i32, i32, i32, i32
  }
  func.func @transform_7(%arg0: i32, %arg1: i32) -> (i32, i32, i32, i32) {
    %c0_i32 = arith.constant 0 : i32
    %c0_i32_0 = arith.constant 0 : i32
    %c0_i32_1 = arith.constant 0 : i32
    return %arg0, %c0_i32, %arg1, %c0_i32_0 : i32, i32, i32, i32
  }
  func.func @transform_8(%arg0: i32, %arg1: i32) -> (i32, i32, i32, i32) {
    %c0_i32 = arith.constant 0 : i32
    %c0_i32_0 = arith.constant 0 : i32
    %c0_i32_1 = arith.constant 0 : i32
    return %arg0, %c0_i32, %arg1, %c0_i32_0 : i32, i32, i32, i32
  }
}

module attributes {stable_mosaic.version = 11 : i64} {
  func.func @attn_ffn_kernel(%arg0: i32, %arg1: i32, %arg2: memref<1x8x32xf32, #tpu.memory_space<vmem>>, %arg3: memref<1x4x8x8xbf16, #tpu.memory_space<vmem>>, %arg4: memref<1x4x8x8xbf16, #tpu.memory_space<vmem>>, %arg5: memref<1x4x8x8xbf16, #tpu.memory_space<vmem>>, %arg6: memref<32x32xbf16, #tpu.memory_space<vmem>>, %arg7: memref<1x32xf32, #tpu.memory_space<vmem>>, %arg8: memref<1x32xf32, #tpu.memory_space<vmem>>, %arg9: memref<1x32xf32, #tpu.memory_space<vmem>>, %arg10: memref<32x64xbf16, #tpu.memory_space<vmem>>, %arg11: memref<1x64xf32, #tpu.memory_space<vmem>>, %arg12: memref<64x32xbf16, #tpu.memory_space<vmem>>, %arg13: memref<1x32xf32, #tpu.memory_space<vmem>>, %arg14: memref<1x32xf32, #tpu.memory_space<vmem>>, %arg15: memref<1x32xf32, #tpu.memory_space<vmem>>, %arg16: memref<1x8x32xf32, #tpu.memory_space<vmem>>, %arg17: memref<8x32xf32, #tpu.memory_space<vmem>>) attributes {dimension_semantics = [#tpu.dimension_semantics<parallel>, #tpu.dimension_semantics<parallel>], iteration_bounds = array<i64: 2, 1>, scalar_prefetch = 0 : i64, scratch_operands = 1 : i64, tpu.core_type = #tpu.core_type<tc>, window_params = [{transform_indices = @transform_0, window_bounds = array<i64: 1, 8, 32>}, {transform_indices = @transform_1, window_bounds = array<i64: 1, 4, 8, 8>}, {transform_indices = @transform_2, window_bounds = array<i64: 1, 4, 8, 8>}, {transform_indices = @transform_3, window_bounds = array<i64: 1, 4, 8, 8>}, {pipeline_mode = #tpu.pipeline_mode<synchronous>, transform_indices = @transform_4, window_bounds = array<i64: 32, 32>}, {pipeline_mode = #tpu.pipeline_mode<synchronous>, transform_indices = @transform_5, window_bounds = array<i64: 1, 32>}, {pipeline_mode = #tpu.pipeline_mode<synchronous>, transform_indices = @transform_6, window_bounds = array<i64: 1, 32>}, {pipeline_mode = #tpu.pipeline_mode<synchronous>, transform_indices = @transform_7, window_bounds = array<i64: 1, 32>}, {pipeline_mode = #tpu.pipeline_mode<synchronous>, transform_indices = @transform_8, window_bounds = array<i64: 32, 64>}, {pipeline_mode = #tpu.pipeline_mode<synchronous>, transform_indices = @transform_9, window_bounds = array<i64: 1, 64>}, {pipeline_mode = #tpu.pipeline_mode<synchronous>, transform_indices = @transform_10, window_bounds = array<i64: 64, 32>}, {pipeline_mode = #tpu.pipeline_mode<synchronous>, transform_indices = @transform_11, window_bounds = array<i64: 1, 32>}, {pipeline_mode = #tpu.pipeline_mode<synchronous>, transform_indices = @transform_12, window_bounds = array<i64: 1, 32>}, {pipeline_mode = #tpu.pipeline_mode<synchronous>, transform_indices = @transform_13, window_bounds = array<i64: 1, 32>}, {transform_indices = @transform_14, window_bounds = array<i64: 1, 8, 32>}]} {
    %c0 = arith.constant 0 : index
    %c0_0 = arith.constant 0 : index
    %c0_1 = arith.constant 0 : index
    %0 = vector.load %arg2[%c0, %c0_0, %c0_1] : memref<1x8x32xf32, #tpu.memory_space<vmem>>, vector<1x8x32xf32>
    %1 = vector.shape_cast %0 : vector<1x8x32xf32> to vector<8x32xf32>
    %c0_2 = arith.constant 0 : index
    %c0_3 = arith.constant 0 : index
    %c0_4 = arith.constant 0 : index
    %c0_5 = arith.constant 0 : index
    %2 = vector.load %arg3[%c0_2, %c0_3, %c0_4, %c0_5] : memref<1x4x8x8xbf16, #tpu.memory_space<vmem>>, vector<1x4x8x8xbf16>
    %3 = vector.shape_cast %2 : vector<1x4x8x8xbf16> to vector<4x8x8xbf16>
    %c0_6 = arith.constant 0 : index
    %c0_7 = arith.constant 0 : index
    %c0_8 = arith.constant 0 : index
    %c0_9 = arith.constant 0 : index
    %4 = vector.load %arg4[%c0_6, %c0_7, %c0_8, %c0_9] : memref<1x4x8x8xbf16, #tpu.memory_space<vmem>>, vector<1x4x8x8xbf16>
    %5 = vector.shape_cast %4 : vector<1x4x8x8xbf16> to vector<4x8x8xbf16>
    %c0_10 = arith.constant 0 : index
    %c0_11 = arith.constant 0 : index
    %c0_12 = arith.constant 0 : index
    %c0_13 = arith.constant 0 : index
    %6 = vector.load %arg5[%c0_10, %c0_11, %c0_12, %c0_13] : memref<1x4x8x8xbf16, #tpu.memory_space<vmem>>, vector<1x4x8x8xbf16>
    %7 = vector.shape_cast %6 : vector<1x4x8x8xbf16> to vector<4x8x8xbf16>
    "tpu.trace_start"() <{level = 10 : i32, message = "hqd,hkd->hqk"}> : () -> ()
    %cst = arith.constant dense<0.000000e+00> : vector<4x8x8xf32>
    %8 = tpu.matmul %3, %5, %cst {dimension_numbers = #tpu.dot_dimension_numbers<[2], [2], [1], [1], [0, 0, 0, 1, 1, 1], [0], [0]>} : vector<4x8x8xbf16>, vector<4x8x8xbf16>, vector<4x8x8xf32> -> vector<4x8x8xf32>
    "tpu.trace_stop"() : () -> ()
    %cst_14 = arith.constant dense<0xFF800000> : vector<4x8xf32>
    %9 = vector.multi_reduction <maximumf>, %8, %cst_14 [2] : vector<4x8x8xf32> to vector<4x8xf32>
    %10 = vector.shape_cast %9 : vector<4x8xf32> to vector<4x8x1xf32>
    %11 = vector.broadcast %10 : vector<4x8x1xf32> to vector<4x8x8xf32>
    %12 = arith.subf %8, %11 : vector<4x8x8xf32>
    %13 = math.exp %12 : vector<4x8x8xf32>
    %cst_15 = arith.constant dense<0.000000e+00> : vector<4x8xf32>
    %14 = vector.multi_reduction <add>, %13, %cst_15 [2] : vector<4x8x8xf32> to vector<4x8xf32>
    %15 = vector.shape_cast %14 : vector<4x8xf32> to vector<4x8x1xf32>
    %16 = arith.truncf %13 : vector<4x8x8xf32> to vector<4x8x8xbf16>
    "tpu.trace_start"() <{level = 10 : i32, message = "hqk,hkd->hqd"}> : () -> ()
    %cst_16 = arith.constant dense<0.000000e+00> : vector<4x8x8xf32>
    %17 = tpu.matmul %16, %7, %cst_16 {dimension_numbers = #tpu.dot_dimension_numbers<[2], [1], [1], [2], [0, 0, 0, 1, 1, 2], [0], [0]>} : vector<4x8x8xbf16>, vector<4x8x8xbf16>, vector<4x8x8xf32> -> vector<4x8x8xf32>
    "tpu.trace_stop"() : () -> ()
    %18 = tpu.reciprocal %15 {approx = true} : vector<4x8x1xf32> -> vector<4x8x1xf32>
    %19 = vector.broadcast %18 : vector<4x8x1xf32> to vector<4x8x8xf32>
    %20 = arith.mulf %17, %19 : vector<4x8x8xf32>
    %21 = vector.extract_strided_slice %20 {offsets = [0, 0, 0], sizes = [1, 8, 8], strides = [1, 1, 1]} : vector<4x8x8xf32> to vector<1x8x8xf32>
    %22 = vector.shape_cast %21 : vector<1x8x8xf32> to vector<8x8xf32>
    %c0_17 = arith.constant 0 : index
    %c0_18 = arith.constant 0 : index
    %23 = vector.load %arg17[%c0_17, %c0_18] : memref<8x32xf32, #tpu.memory_space<vmem>>, vector<8x8xf32>
    tpu.vector_store %arg17[%c0_17, %c0_18], %22 {strides = array<i32>} : memref<8x32xf32, #tpu.memory_space<vmem>>, vector<8x8xf32>,
    %24 = vector.extract_strided_slice %20 {offsets = [1, 0, 0], sizes = [1, 8, 8], strides = [1, 1, 1]} : vector<4x8x8xf32> to vector<1x8x8xf32>
    %25 = vector.shape_cast %24 : vector<1x8x8xf32> to vector<8x8xf32>
    %c0_19 = arith.constant 0 : index
    %c8 = arith.constant 8 : index
    %26 = vector.load %arg17[%c0_19, %c8] : memref<8x32xf32, #tpu.memory_space<vmem>>, vector<8x8xf32>
    tpu.vector_store %arg17[%c0_19, %c8], %25 {strides = array<i32>} : memref<8x32xf32, #tpu.memory_space<vmem>>, vector<8x8xf32>,
    %27 = vector.extract_strided_slice %20 {offsets = [2, 0, 0], sizes = [1, 8, 8], strides = [1, 1, 1]} : vector<4x8x8xf32> to vector<1x8x8xf32>
    %28 = vector.shape_cast %27 : vector<1x8x8xf32> to vector<8x8xf32>
    %c0_20 = arith.constant 0 : index
    %c16 = arith.constant 16 : index
    %29 = vector.load %arg17[%c0_20, %c16] : memref<8x32xf32, #tpu.memory_space<vmem>>, vector<8x8xf32>
    tpu.vector_store %arg17[%c0_20, %c16], %28 {strides = array<i32>} : memref<8x32xf32, #tpu.memory_space<vmem>>, vector<8x8xf32>,
    %30 = vector.extract_strided_slice %20 {offsets = [3, 0, 0], sizes = [1, 8, 8], strides = [1, 1, 1]} : vector<4x8x8xf32> to vector<1x8x8xf32>
    %31 = vector.shape_cast %30 : vector<1x8x8xf32> to vector<8x8xf32>
    %c0_21 = arith.constant 0 : index
    %c24 = arith.constant 24 : index
    %32 = vector.load %arg17[%c0_21, %c24] : memref<8x32xf32, #tpu.memory_space<vmem>>, vector<8x8xf32>
    tpu.vector_store %arg17[%c0_21, %c24], %31 {strides = array<i32>} : memref<8x32xf32, #tpu.memory_space<vmem>>, vector<8x8xf32>,
    %c0_22 = arith.constant 0 : index
    %c0_23 = arith.constant 0 : index
    %33 = vector.load %arg17[%c0_22, %c0_23] : memref<8x32xf32, #tpu.memory_space<vmem>>, vector<8x32xf32>
    %34 = arith.truncf %33 : vector<8x32xf32> to vector<8x32xbf16>
    %c0_24 = arith.constant 0 : index
    %c0_25 = arith.constant 0 : index
    %35 = vector.load %arg6[%c0_24, %c0_25] : memref<32x32xbf16, #tpu.memory_space<vmem>>, vector<32x32xbf16>
    %cst_26 = arith.constant dense<0.000000e+00> : vector<8x32xf32>
    %36 = tpu.matmul %34, %35, %cst_26 {dimension_numbers = #tpu.dot_dimension_numbers<[1], [0], [0], [1], [0, 0, 1, 1], [], []>} : vector<8x32xbf16>, vector<32x32xbf16>, vector<8x32xf32> -> vector<8x32xf32>
    %c0_27 = arith.constant 0 : index
    %c0_28 = arith.constant 0 : index
    %37 = vector.load %arg7[%c0_27, %c0_28] : memref<1x32xf32, #tpu.memory_space<vmem>>, vector<1x32xf32>
    %38 = vector.broadcast %37 : vector<1x32xf32> to vector<8x32xf32>
    %39 = arith.addf %36, %38 : vector<8x32xf32>
    %40 = arith.addf %1, %39 : vector<8x32xf32>
    %cst_29 = arith.constant dense<0.000000e+00> : vector<8xf32>
    %41 = vector.multi_reduction <add>, %40, %cst_29 [1] : vector<8x32xf32> to vector<8xf32>
    %42 = vector.shape_cast %41 : vector<8xf32> to vector<8x1xf32>
    %cst_30 = arith.constant 3.200000e+01 : f32
    %43 = vector.broadcast %cst_30 : f32 to vector<8x1xf32>
    %44 = arith.divf %42, %43 : vector<8x1xf32>
    %45 = vector.broadcast %44 : vector<8x1xf32> to vector<8x32xf32>
    %46 = arith.subf %40, %45 : vector<8x32xf32>
    %47 = arith.mulf %46, %46 : vector<8x32xf32>
    %cst_31 = arith.constant dense<0.000000e+00> : vector<8xf32>
    %48 = vector.multi_reduction <add>, %47, %cst_31 [1] : vector<8x32xf32> to vector<8xf32>
    %49 = vector.shape_cast %48 : vector<8xf32> to vector<8x1xf32>
    %cst_32 = arith.constant 3.200000e+01 : f32
    %50 = vector.broadcast %cst_32 : f32 to vector<8x1xf32>
    %51 = arith.divf %49, %50 : vector<8x1xf32>
    %52 = vector.broadcast %44 : vector<8x1xf32> to vector<8x32xf32>
    %53 = arith.subf %40, %52 : vector<8x32xf32>
    %cst_33 = arith.constant 9.99999974E-6 : f32
    %54 = vector.broadcast %cst_33 : f32 to vector<8x1xf32>
    %55 = arith.addf %51, %54 : vector<8x1xf32>
    %56 = math.rsqrt %55 : vector<8x1xf32>
    %57 = vector.broadcast %56 : vector<8x1xf32> to vector<8x32xf32>
    %58 = arith.mulf %53, %57 : vector<8x32xf32>
    %c0_34 = arith.constant 0 : index
    %c0_35 = arith.constant 0 : index
    %59 = vector.load %arg8[%c0_34, %c0_35] : memref<1x32xf32, #tpu.memory_space<vmem>>, vector<1x32xf32>
    %60 = vector.broadcast %59 : vector<1x32xf32> to vector<8x32xf32>
    %61 = arith.mulf %58, %60 : vector<8x32xf32>
    %c0_36 = arith.constant 0 : index
    %c0_37 = arith.constant 0 : index
    %62 = vector.load %arg9[%c0_36, %c0_37] : memref<1x32xf32, #tpu.memory_space<vmem>>, vector<1x32xf32>
    %63 = vector.broadcast %62 : vector<1x32xf32> to vector<8x32xf32>
    %64 = arith.addf %61, %63 : vector<8x32xf32>
    %65 = arith.truncf %64 : vector<8x32xf32> to vector<8x32xbf16>
    %c0_38 = arith.constant 0 : index
    %c0_39 = arith.constant 0 : index
    %66 = vector.load %arg10[%c0_38, %c0_39] : memref<32x64xbf16, #tpu.memory_space<vmem>>, vector<32x64xbf16>
    %cst_40 = arith.constant dense<0.000000e+00> : vector<8x64xf32>
    %67 = tpu.matmul %65, %66, %cst_40 {dimension_numbers = #tpu.dot_dimension_numbers<[1], [0], [0], [1], [0, 0, 1, 1], [], []>} : vector<8x32xbf16>, vector<32x64xbf16>, vector<8x64xf32> -> vector<8x64xf32>
    %c0_41 = arith.constant 0 : index
    %c0_42 = arith.constant 0 : index
    %68 = vector.load %arg11[%c0_41, %c0_42] : memref<1x64xf32, #tpu.memory_space<vmem>>, vector<1x64xf32>
    %69 = vector.broadcast %68 : vector<1x64xf32> to vector<8x64xf32>
    %70 = arith.addf %67, %69 : vector<8x64xf32>
    %cst_43 = arith.constant 0.000000e+00 : f32
    %71 = vector.broadcast %cst_43 : f32 to vector<8x64xf32>
    %72 = arith.maximumf %70, %71 : vector<8x64xf32>
    %73 = arith.truncf %72 : vector<8x64xf32> to vector<8x64xbf16>
    %c0_44 = arith.constant 0 : index
    %c0_45 = arith.constant 0 : index
    %74 = vector.load %arg12[%c0_44, %c0_45] : memref<64x32xbf16, #tpu.memory_space<vmem>>, vector<64x32xbf16>
    %cst_46 = arith.constant dense<0.000000e+00> : vector<8x32xf32>
    %75 = tpu.matmul %73, %74, %cst_46 {dimension_numbers = #tpu.dot_dimension_numbers<[1], [0], [0], [1], [0, 0, 1, 1], [], []>} : vector<8x64xbf16>, vector<64x32xbf16>, vector<8x32xf32> -> vector<8x32xf32>
    %c0_47 = arith.constant 0 : index
    %c0_48 = arith.constant 0 : index
    %76 = vector.load %arg13[%c0_47, %c0_48] : memref<1x32xf32, #tpu.memory_space<vmem>>, vector<1x32xf32>
    %77 = vector.broadcast %76 : vector<1x32xf32> to vector<8x32xf32>
    %78 = arith.addf %75, %77 : vector<8x32xf32>
    %79 = arith.addf %64, %78 : vector<8x32xf32>
    %cst_49 = arith.constant dense<0.000000e+00> : vector<8xf32>
    %80 = vector.multi_reduction <add>, %79, %cst_49 [1] : vector<8x32xf32> to vector<8xf32>
    %81 = vector.shape_cast %80 : vector<8xf32> to vector<8x1xf32>
    %cst_50 = arith.constant 3.200000e+01 : f32
    %82 = vector.broadcast %cst_50 : f32 to vector<8x1xf32>
    %83 = arith.divf %81, %82 : vector<8x1xf32>
    %84 = vector.broadcast %83 : vector<8x1xf32> to vector<8x32xf32>
    %85 = arith.subf %79, %84 : vector<8x32xf32>
    %86 = arith.mulf %85, %85 : vector<8x32xf32>
    %cst_51 = arith.constant dense<0.000000e+00> : vector<8xf32>
    %87 = vector.multi_reduction <add>, %86, %cst_51 [1] : vector<8x32xf32> to vector<8xf32>
    %88 = vector.shape_cast %87 : vector<8xf32> to vector<8x1xf32>
    %cst_52 = arith.constant 3.200000e+01 : f32
    %89 = vector.broadcast %cst_52 : f32 to vector<8x1xf32>
    %90 = arith.divf %88, %89 : vector<8x1xf32>
    %91 = vector.broadcast %83 : vector<8x1xf32> to vector<8x32xf32>
    %92 = arith.subf %79, %91 : vector<8x32xf32>
    %cst_53 = arith.constant 9.99999974E-6 : f32
    %93 = vector.broadcast %cst_53 : f32 to vector<8x1xf32>
    %94 = arith.addf %90, %93 : vector<8x1xf32>
    %95 = math.rsqrt %94 : vector<8x1xf32>
    %96 = vector.broadcast %95 : vector<8x1xf32> to vector<8x32xf32>
    %97 = arith.mulf %92, %96 : vector<8x32xf32>
    %c0_54 = arith.constant 0 : index
    %c0_55 = arith.constant 0 : index
    %98 = vector.load %arg14[%c0_54, %c0_55] : memref<1x32xf32, #tpu.memory_space<vmem>>, vector<1x32xf32>
    %99 = vector.broadcast %98 : vector<1x32xf32> to vector<8x32xf32>
    %100 = arith.mulf %97, %99 : vector<8x32xf32>
    %c0_56 = arith.constant 0 : index
    %c0_57 = arith.constant 0 : index
    %101 = vector.load %arg15[%c0_56, %c0_57] : memref<1x32xf32, #tpu.memory_space<vmem>>, vector<1x32xf32>
    %102 = vector.broadcast %101 : vector<1x32xf32> to vector<8x32xf32>
    %103 = arith.addf %100, %102 : vector<8x32xf32>
    %c0_58 = arith.constant 0 : index
    %c0_59 = arith.constant 0 : index
    %c0_60 = arith.constant 0 : index
    %104 = vector.load %arg16[%c0_58, %c0_59, %c0_60] : memref<1x8x32xf32, #tpu.memory_space<vmem>>, vector<1x8x32xf32>
    %105 = vector.shape_cast %104 : vector<1x8x32xf32> to vector<8x32xf32>
    %106 = vector.shape_cast %103 : vector<8x32xf32> to vector<1x8x32xf32>
    tpu.vector_store %arg16[%c0_58, %c0_59, %c0_60], %106 {strides = array<i32>} : memref<1x8x32xf32, #tpu.memory_space<vmem>>, vector<1x8x32xf32>,
    return
  }
  func.func @transform_0(%arg0: i32, %arg1: i32) -> (i32, i32, i32) {
    %c0_i32 = arith.constant 0 : i32
    %c0_i32_0 = arith.constant 0 : i32
    return %arg0, %arg1, %c0_i32 : i32, i32, i32
  }
  func.func @transform_1(%arg0: i32, %arg1: i32) -> (i32, i32, i32, i32) {
    %c0_i32 = arith.constant 0 : i32
    %c0_i32_0 = arith.constant 0 : i32
    %c0_i32_1 = arith.constant 0 : i32
    return %arg0, %c0_i32, %arg1, %c0_i32_0 : i32, i32, i32, i32
  }
  func.func @transform_2(%arg0: i32, %arg1: i32) -> (i32, i32, i32, i32) {
    %c0_i32 = arith.constant 0 : i32
    %c0_i32_0 = arith.constant 0 : i32
    %c0_i32_1 = arith.constant 0 : i32
    %c0_i32_2 = arith.constant 0 : i32
    return %arg0, %c0_i32, %c0_i32_0, %c0_i32_1 : i32, i32, i32, i32
  }
  func.func @transform_3(%arg0: i32, %arg1: i32) -> (i32, i32, i32, i32) {
    %c0_i32 = arith.constant 0 : i32
    %c0_i32_0 = arith.constant 0 : i32
    %c0_i32_1 = arith.constant 0 : i32
    %c0_i32_2 = arith.constant 0 : i32
    return %arg0, %c0_i32, %c0_i32_0, %c0_i32_1 : i32, i32, i32, i32
  }
  func.func @transform_4(%arg0: i32, %arg1: i32) -> (i32, i32) {
    %c0_i32 = arith.constant 0 : i32
    %c0_i32_0 = arith.constant 0 : i32
    %c0_i32_1 = arith.constant 0 : i32
    return %c0_i32, %c0_i32_0 : i32, i32
  }
  func.func @transform_5(%arg0: i32, %arg1: i32) -> (i32, i32) {
    %c0_i32 = arith.constant 0 : i32
    %c0_i32_0 = arith.constant 0 : i32
    %c0_i32_1 = arith.constant 0 : i32
    return %c0_i32, %c0_i32_0 : i32, i32
  }
  func.func @transform_6(%arg0: i32, %arg1: i32) -> (i32, i32) {
    %c0_i32 = arith.constant 0 : i32
    %c0_i32_0 = arith.constant 0 : i32
    %c0_i32_1 = arith.constant 0 : i32
    return %c0_i32, %c0_i32_0 : i32, i32
  }
  func.func @transform_7(%arg0: i32, %arg1: i32) -> (i32, i32) {
    %c0_i32 = arith.constant 0 : i32
    %c0_i32_0 = arith.constant 0 : i32
    %c0_i32_1 = arith.constant 0 : i32
    return %c0_i32, %c0_i32_0 : i32, i32
  }
  func.func @transform_8(%arg0: i32, %arg1: i32) -> (i32, i32) {
    %c0_i32 = arith.constant 0 : i32
    %c0_i32_0 = arith.constant 0 : i32
    %c0_i32_1 = arith.constant 0 : i32
    return %c0_i32, %c0_i32_0 : i32, i32
  }
  func.func @transform_9(%arg0: i32, %arg1: i32) -> (i32, i32) {
    %c0_i32 = arith.constant 0 : i32
    %c0_i32_0 = arith.constant 0 : i32
    %c0_i32_1 = arith.constant 0 : i32
    return %c0_i32, %c0_i32_0 : i32, i32
  }
  func.func @transform_10(%arg0: i32, %arg1: i32) -> (i32, i32) {
    %c0_i32 = arith.constant 0 : i32
    %c0_i32_0 = arith.constant 0 : i32
    %c0_i32_1 = arith.constant 0 : i32
    return %c0_i32, %c0_i32_0 : i32, i32
  }
  func.func @transform_11(%arg0: i32, %arg1: i32) -> (i32, i32) {
    %c0_i32 = arith.constant 0 : i32
    %c0_i32_0 = arith.constant 0 : i32
    %c0_i32_1 = arith.constant 0 : i32
    return %c0_i32, %c0_i32_0 : i32, i32
  }
  func.func @transform_12(%arg0: i32, %arg1: i32) -> (i32, i32) {
    %c0_i32 = arith.constant 0 : i32
    %c0_i32_0 = arith.constant 0 : i32
    %c0_i32_1 = arith.constant 0 : i32
    return %c0_i32, %c0_i32_0 : i32, i32
  }
  func.func @transform_13(%arg0: i32, %arg1: i32) -> (i32, i32) {
    %c0_i32 = arith.constant 0 : i32
    %c0_i32_0 = arith.constant 0 : i32
    %c0_i32_1 = arith.constant 0 : i32
    return %c0_i32, %c0_i32_0 : i32, i32
  }
  func.func @transform_14(%arg0: i32, %arg1: i32) -> (i32, i32, i32) {
    %c0_i32 = arith.constant 0 : i32
    %c0_i32_0 = arith.constant 0 : i32
    return %arg0, %arg1, %c0_i32 : i32, i32, i32
  }
}

</mosaic_0001>

<llo_original>
// kernel: transformer_encoder.4
$region0: #{transformer_encoder.4}
  #allocation0 [shape = 'u32[]', space=smem, size = 0x4, offset = 0x4, fixed_abs, tag = 'smem constant byte address 0x4 - core index']
  #allocation1 [shape = 'u32[144,128]{1,0:T(1,128)}', space=vmem, size = 0x12000, scoped, tag = 'internal scratch']
  %s0 = inlined_call_operand.vmem [shape: f32[2,8,32], index: 0, kind: input, shape index: {}]
  %s1 = inlined_call_operand.vmem [shape: bf16[2,8,32], index: 1, kind: input, shape index: {}]
  %s2 = inlined_call_operand.vmem [shape: bf16[32,64], index: 2, kind: input, shape index: {}]
  %s3 = inlined_call_operand.vmem [shape: f32[1,64], index: 3, kind: input, shape index: {}]
  %s4 = inlined_call_operand.vmem [shape: bf16[32,32], index: 4, kind: input, shape index: {}]
  %s5 = inlined_call_operand.vmem [shape: f32[1,32], index: 5, kind: input, shape index: {}]
  %s6 = inlined_call_operand.vmem [shape: bf16[2,4,8,8], index: 6, kind: output, shape index: {0}]
  %s7 = inlined_call_operand.vmem [shape: bf16[2,4,8,8], index: 7, kind: output, shape index: {1}]
  %s8 = inlined_call_operand.vmem [shape: bf16[2,4,8,8], index: 8, kind: output, shape index: {2}]
  %9 = xla_tuple %s6, %s7, %s8
  %s10 = sld [smem:[#allocation0]]
  $region73: #{transformer_encoder.4} parent=0
    _
  %s12 = ssub.s32 1, %s10
  %s13 = scalar_select 0, %s12, %s10
  loop: start=0, step=1, limit=4
  $region2: #{transformer_encoder.4} parent=0 // loop_pre_header
    _
  $region3: #{transformer_encoder.4} parent=0 // loop_header
    %s15 = sphi 0, %s19
    %p16 = scmp.ge.s32.totalorder %s15, 4
    %s22 = sphi 0, %s34
    %s23 = sphi 0, %s30
    %s24 = sphi 0, %s22
    %s25 = sphi 0, %s23
    %s26 = sphi 0, %s24
    %s27 = sphi 0, %s25
    %s39 = sphi 0, %s41
    %s42 = sphi 0, %s39
    %s43 = sphi 0, %s42
    %s59 = sphi 0, %s43
    %s67 = sphi 0, %s69
    %s70 = sphi 0, %s67
    %s71 = sphi 0, %s70
    %s87 = sphi 0, %s71
    %s91 = sphi 0, %s91
    %s93 = sphi 0, %s91
    %s94 = sphi 0, %s93
    %s108 = sphi 0, %s94
    %s112 = sphi 0, %s112
    %s114 = sphi 0, %s112
    %s115 = sphi 0, %s114
    %s129 = sphi 0, %s115
    %s133 = sphi 0, %s133
    %s135 = sphi 0, %s133
    %s136 = sphi 0, %s135
    %s150 = sphi 0, %s136
    %s154 = sphi 0, %s154
    %s156 = sphi 0, %s154
    %s157 = sphi 0, %s156
    %s171 = sphi 0, %s157
    %s179 = sphi 0, %s181
    %s182 = sphi 0, %s179
    %s183 = sphi 0, %s182
    %s199 = sphi 0, %s183
    %s207 = sphi 0, %s209
    %s210 = sphi 0, %s207
    %s211 = sphi 0, %s210
    %s227 = sphi 0, %s211
    %s235 = sphi 0, %s237
    %s238 = sphi 0, %s235
    %s239 = sphi 0, %s238
    %s255 = sphi 0, %s239
  $region4: #{transformer_encoder.4} parent=0 // loop_header_branch
    %18 = sbr.rel (%p16) target = $region8
  $region5: #{transformer_encoder.4} parent=0 // loop_body
    %s20 = ssub.s32 %s15, 1
    %s21 = ssub.s32 %s15, 2
    %s28 = sadd.s32 1, %s23
    %p29 = scmp.ge.s32.totalorder %s28, 1
    %s30 = scalar_select %p29, 0, %s28
    %s31 = sadd.s32 1, %s22
    %s32 = scalar_select %p29, %s31, %s22
    %p33 = scmp.ge.s32.totalorder %s32, 2
    %s34 = scalar_select %p33, 0, %s32
    %s35 = ssub.s32 %s22, %s34
    %s36 = ssub.s32 %s23, %s30
    %s37 = sor.u32 %s35, %s36
    %p38 = scmp.eq.s32.totalorder %s37, 0
    %s40 = sadd.s32 %s39, 1
    %s41 = scalar_select %p38, %s39, %s40
    %p44 = pneg %p38
    %p45 = scmp.eq.s32.totalorder %s15, 1
    %p46 = por %p44, %p45
    %p47 = scmp.ne.s32.totalorder %s39, %s42
    %p48 = scmp.eq.s32.totalorder %s15, 0
    %p49 = por %p47, %p48
    %p50 = scmp.ne.s32.totalorder %s39, %s42
    %p51 = scmp.eq.s32.totalorder %s20, 1
    %p52 = por %p50, %p51
    %p53 = scmp.ne.s32.totalorder %s42, %s43
    %p54 = scmp.eq.s32.totalorder %s20, 0
    %p55 = por %p53, %p54
    %p56 = scmp.ne.s32.totalorder %s42, %s43
    %p57 = scmp.eq.s32.totalorder %s21, 1
    %p58 = por %p56, %p57
    %p60 = scmp.ne.s32.totalorder %s43, %s59
    %p61 = scmp.eq.s32.totalorder %s21, 0
    %p62 = por %p60, %p61
    %s63 = ssub.s32 %s22, %s34
    %s64 = ssub.s32 %s23, %s30
    %s65 = sor.u32 %s63, %s64
    %p66 = scmp.eq.s32.totalorder %s65, 0
    %s68 = sadd.s32 %s67, 1
    %s69 = scalar_select %p66, %s67, %s68
    %p72 = pneg %p66
    %p73 = scmp.eq.s32.totalorder %s15, 1
    %p74 = por %p72, %p73
    %p75 = scmp.ne.s32.totalorder %s67, %s70
    %p76 = scmp.eq.s32.totalorder %s15, 0
    %p77 = por %p75, %p76
    %p78 = scmp.ne.s32.totalorder %s67, %s70
    %p79 = scmp.eq.s32.totalorder %s20, 1
    %p80 = por %p78, %p79
    %p81 = scmp.ne.s32.totalorder %s70, %s71
    %p82 = scmp.eq.s32.totalorder %s20, 0
    %p83 = por %p81, %p82
    %p84 = scmp.ne.s32.totalorder %s70, %s71
    %p85 = scmp.eq.s32.totalorder %s21, 1
    %p86 = por %p84, %p85
    %p88 = scmp.ne.s32.totalorder %s71, %s87
    %p89 = scmp.eq.s32.totalorder %s21, 0
    %p90 = por %p88, %p89
    %s92 = sadd.s32 %s91, 1
    %p95 = scmp.eq.s32.totalorder %s15, 1
    %p96 = scmp.ne.s32.totalorder %s91, %s93
    %p97 = scmp.eq.s32.totalorder %s15, 0
    %p98 = por %p96, %p97
    %p99 = scmp.ne.s32.totalorder %s91, %s93
    %p100 = scmp.eq.s32.totalorder %s20, 1
    %p101 = por %p99, %p100
    %p102 = scmp.ne.s32.totalorder %s93, %s94
    %p103 = scmp.eq.s32.totalorder %s20, 0
    %p104 = por %p102, %p103
    %p105 = scmp.ne.s32.totalorder %s93, %s94
    %p106 = scmp.eq.s32.totalorder %s21, 1
    %p107 = por %p105, %p106
    %p109 = scmp.ne.s32.totalorder %s94, %s108
    %p110 = scmp.eq.s32.totalorder %s21, 0
    %p111 = por %p109, %p110
    %s113 = sadd.s32 %s112, 1
    %p116 = scmp.eq.s32.totalorder %s15, 1
    %p117 = scmp.ne.s32.totalorder %s112, %s114
    %p118 = scmp.eq.s32.totalorder %s15, 0
    %p119 = por %p117, %p118
    %p120 = scmp.ne.s32.totalorder %s112, %s114
    %p121 = scmp.eq.s32.totalorder %s20, 1
    %p122 = por %p120, %p121
    %p123 = scmp.ne.s32.totalorder %s114, %s115
    %p124 = scmp.eq.s32.totalorder %s20, 0
    %p125 = por %p123, %p124
    %p126 = scmp.ne.s32.totalorder %s114, %s115
    %p127 = scmp.eq.s32.totalorder %s21, 1
    %p128 = por %p126, %p127
    %p130 = scmp.ne.s32.totalorder %s115, %s129
    %p131 = scmp.eq.s32.totalorder %s21, 0
    %p132 = por %p130, %p131
    %s134 = sadd.s32 %s133, 1
    %p137 = scmp.eq.s32.totalorder %s15, 1
    %p138 = scmp.ne.s32.totalorder %s133, %s135
    %p139 = scmp.eq.s32.totalorder %s15, 0
    %p140 = por %p138, %p139
    %p141 = scmp.ne.s32.totalorder %s133, %s135
    %p142 = scmp.eq.s32.totalorder %s20, 1
    %p143 = por %p141, %p142
    %p144 = scmp.ne.s32.totalorder %s135, %s136
    %p145 = scmp.eq.s32.totalorder %s20, 0
    %p146 = por %p144, %p145
    %p147 = scmp.ne.s32.totalorder %s135, %s136
    %p148 = scmp.eq.s32.totalorder %s21, 1
    %p149 = por %p147, %p148
    %p151 = scmp.ne.s32.totalorder %s136, %s150
    %p152 = scmp.eq.s32.totalorder %s21, 0
    %p153 = por %p151, %p152
    %s155 = sadd.s32 %s154, 1
    %p158 = scmp.eq.s32.totalorder %s15, 1
    %p159 = scmp.ne.s32.totalorder %s154, %s156
    %p160 = scmp.eq.s32.totalorder %s15, 0
    %p161 = por %p159, %p160
    %p162 = scmp.ne.s32.totalorder %s154, %s156
    %p163 = scmp.eq.s32.totalorder %s20, 1
    %p164 = por %p162, %p163
    %p165 = scmp.ne.s32.totalorder %s156, %s157
    %p166 = scmp.eq.s32.totalorder %s20, 0
    %p167 = por %p165, %p166
    %p168 = scmp.ne.s32.totalorder %s156, %s157
    %p169 = scmp.eq.s32.totalorder %s21, 1
    %p170 = por %p168, %p169
    %p172 = scmp.ne.s32.totalorder %s157, %s171
    %p173 = scmp.eq.s32.totalorder %s21, 0
    %p174 = por %p172, %p173
    %s175 = ssub.s32 %s22, %s34
    %s176 = ssub.s32 %s23, %s30
    %s177 = sor.u32 %s175, %s176
    %p178 = scmp.eq.s32.totalorder %s177, 0
    %s180 = sadd.s32 %s179, 1
    %s181 = scalar_select %p178, %s179, %s180
    %p184 = pneg %p178
    %p185 = scmp.eq.s32.totalorder %s15, 1
    %p186 = por %p184, %p185
    %p187 = scmp.ne.s32.totalorder %s179, %s182
    %p188 = scmp.eq.s32.totalorder %s15, 0
    %p189 = por %p187, %p188
    %p190 = scmp.ne.s32.totalorder %s179, %s182
    %p191 = scmp.eq.s32.totalorder %s20, 1
    %p192 = por %p190, %p191
    %p193 = scmp.ne.s32.totalorder %s182, %s183
    %p194 = scmp.eq.s32.totalorder %s20, 0
    %p195 = por %p193, %p194
    %p196 = scmp.ne.s32.totalorder %s182, %s183
    %p197 = scmp.eq.s32.totalorder %s21, 1
    %p198 = por %p196, %p197
    %p200 = scmp.ne.s32.totalorder %s183, %s199
    %p201 = scmp.eq.s32.totalorder %s21, 0
    %p202 = por %p200, %p201
    %s203 = ssub.s32 %s22, %s34
    %s204 = ssub.s32 %s23, %s30
    %s205 = sor.u32 %s203, %s204
    %p206 = scmp.eq.s32.totalorder %s205, 0
    %s208 = sadd.s32 %s207, 1
    %s209 = scalar_select %p206, %s207, %s208
    %p212 = pneg %p206
    %p213 = scmp.eq.s32.totalorder %s15, 1
    %p214 = por %p212, %p213
    %p215 = scmp.ne.s32.totalorder %s207, %s210
    %p216 = scmp.eq.s32.totalorder %s15, 0
    %p217 = por %p215, %p216
    %p218 = scmp.ne.s32.totalorder %s207, %s210
    %p219 = scmp.eq.s32.totalorder %s20, 1
    %p220 = por %p218, %p219
    %p221 = scmp.ne.s32.totalorder %s210, %s211
    %p222 = scmp.eq.s32.totalorder %s20, 0
    %p223 = por %p221, %p222
    %p224 = scmp.ne.s32.totalorder %s210, %s211
    %p225 = scmp.eq.s32.totalorder %s21, 1
    %p226 = por %p224, %p225
    %p228 = scmp.ne.s32.totalorder %s211, %s227
    %p229 = scmp.eq.s32.totalorder %s21, 0
    %p230 = por %p228, %p229
    %s231 = ssub.s32 %s22, %s34
    %s232 = ssub.s32 %s23, %s30
    %s233 = sor.u32 %s231, %s232
    %p234 = scmp.eq.s32.totalorder %s233, 0
    %s236 = sadd.s32 %s235, 1
    %s237 = scalar_select %p234, %s235, %s236
    %p240 = pneg %p234
    %p241 = scmp.eq.s32.totalorder %s15, 1
    %p242 = por %p240, %p241
    %p243 = scmp.ne.s32.totalorder %s235, %s238
    %p244 = scmp.eq.s32.totalorder %s15, 0
    %p245 = por %p243, %p244
    %p246 = scmp.ne.s32.totalorder %s235, %s238
    %p247 = scmp.eq.s32.totalorder %s20, 1
    %p248 = por %p246, %p247
    %p249 = scmp.ne.s32.totalorder %s238, %s239
    %p250 = scmp.eq.s32.totalorder %s20, 0
    %p251 = por %p249, %p250
    %p252 = scmp.ne.s32.totalorder %s238, %s239
    %p253 = scmp.eq.s32.totalorder %s21, 1
    %p254 = por %p252, %p253
    %p256 = scmp.ne.s32.totalorder %s239, %s255
    %p257 = scmp.eq.s32.totalorder %s21, 0
    %p258 = por %p256, %p257
    %p259 = scmp.le.s32.totalorder 1, %s15
    %p260 = scmp.lt.s32.totalorder %s15, 3
    %p261 = pnand %p259, %p260
    %p262 = pneg %p261
    // Predicated region
    $region9: #{transformer_encoder.4} parent=5 // pred_check
      _
    $region10: #{transformer_encoder.4} parent=5 // pred_check_branch
      %264 = sbr.rel (%p261) target = $region12
    $region11: #{transformer_encoder.4} parent=5 // pred_region
      %s265 = ssub.s32 %s15, 1
      // Predicated region
      $region13: #{transformer_encoder.4} parent=11 // pred_check
        %p266 = pneg %p104
      $region14: #{transformer_encoder.4} parent=11 // pred_check_branch
        %268 = sbr.rel (%p266) target = $region16
      $region15: #{transformer_encoder.4} parent=11 // pred_region
        _
      $region16: #{transformer_encoder.4} parent=11 // pred_fallthru
        _
      // Predicated region
      $region17: #{transformer_encoder.4} parent=11 // pred_check
        %p269 = pneg %p125
      $region18: #{transformer_encoder.4} parent=11 // pred_check_branch
        %271 = sbr.rel (%p269) target = $region20
      $region19: #{transformer_encoder.4} parent=11 // pred_region
        _
      $region20: #{transformer_encoder.4} parent=11 // pred_fallthru
        _
      // Predicated region
      $region21: #{transformer_encoder.4} parent=11 // pred_check
        %p272 = pneg %p146
      $region22: #{transformer_encoder.4} parent=11 // pred_check_branch
        %274 = sbr.rel (%p272) target = $region24
      $region23: #{transformer_encoder.4} parent=11 // pred_region
        _
      $region24: #{transformer_encoder.4} parent=11 // pred_fallthru
        _
      // Predicated region
      $region25: #{transformer_encoder.4} parent=11 // pred_check
        %p275 = pneg %p167
      $region26: #{transformer_encoder.4} parent=11 // pred_check_branch
        %277 = sbr.rel (%p275) target = $region28
      $region27: #{transformer_encoder.4} parent=11 // pred_region
        _
      $region28: #{transformer_encoder.4} parent=11 // pred_fallthru
        _
    $region12: #{transformer_encoder.4} parent=5 // pred_fallthru
      _
    %p278 = scmp.lt.s32.totalorder %s15, 2
    // Predicated region
    $region29: #{transformer_encoder.4} parent=5 // pred_check
      %p279 = pneg %p278
    $region30: #{transformer_encoder.4} parent=5 // pred_check_branch
      %281 = sbr.rel (%p279) target = $region32
    $region31: #{transformer_encoder.4} parent=5 // pred_region
      // Predicated region
      $region33: #{transformer_encoder.4} parent=31 // pred_check
        %p282 = pneg %p49
      $region34: #{transformer_encoder.4} parent=31 // pred_check_branch
        %284 = sbr.rel (%p282) target = $region36
      $region35: #{transformer_encoder.4} parent=31 // pred_region
        %p285 = scmp.lt.s32.totalorder %s22, 1
        %s286 = scalar_select %p285, %s22, 1
        %p287 = scmp.lt.s32.totalorder %s23, 0
        %s288 = scalar_select %p287, %s23, 0
        %s289 = sadd.s32 %s288, %s286
        %s290 = smul.addr %s289, 8
        %s291 = scalar_lea.vmem %s0, %s290
      $region36: #{transformer_encoder.4} parent=31 // pred_fallthru
        _
      // Predicated region
      $region37: #{transformer_encoder.4} parent=31 // pred_check
        %p292 = pneg %p77
      $region38: #{transformer_encoder.4} parent=31 // pred_check_branch
        %294 = sbr.rel (%p292) target = $region40
      $region39: #{transformer_encoder.4} parent=31 // pred_region
        %p295 = scmp.lt.s32.totalorder %s22, 1
        %s296 = scalar_select %p295, %s22, 1
        %p297 = scmp.lt.s32.totalorder %s23, 0
        %s298 = scalar_select %p297, %s23, 0
        %s299 = sadd.s32 %s298, %s296
        %s300 = smul.addr %s299, 4
        %s301 = scalar_lea.vmem %s1, %s300
      $region40: #{transformer_encoder.4} parent=31 // pred_fallthru
        _
    $region32: #{transformer_encoder.4} parent=5 // pred_fallthru
      _
    %p302 = scmp.le.s32.totalorder 1, %s15
    %p303 = scmp.lt.s32.totalorder %s15, 3
    %p304 = pnand %p302, %p303
    %p305 = pneg %p304
    // Predicated region
    $region41: #{transformer_encoder.4} parent=5 // pred_check
      _
    $region42: #{transformer_encoder.4} parent=5 // pred_check_branch
      %307 = sbr.rel (%p304) target = $region44
    $region43: #{transformer_encoder.4} parent=5 // pred_region
      %s308 = ssub.s32 %s15, 1
      %p309 = scmp.lt.s32.totalorder %s24, 1
      %s310 = scalar_select %p309, %s24, 1
      %p311 = scmp.lt.s32.totalorder %s25, 0
      %s312 = scalar_select %p311, %s25, 0
      %s313 = sadd.s32 %s312, %s310
      %s314 = smul.addr %s313, 8
      %s315 = scalar_lea.vmem %s0, %s314
      %p316 = pneg %p55
      %p317 = pneg %p52
      %p318 = scmp.lt.s32.totalorder %s24, 1
      %s319 = scalar_select %p318, %s24, 1
      %p320 = scmp.lt.s32.totalorder %s25, 0
      %s321 = scalar_select %p320, %s25, 0
      %s322 = sadd.s32 %s321, %s319
      %s323 = smul.addr %s322, 4
      %s324 = scalar_lea.vmem %s1, %s323
      %p325 = pneg %p83
      %p326 = pneg %p80
      %p327 = pneg %p104
      %p328 = pneg %p101
      %p329 = pneg %p125
      %p330 = pneg %p122
      %p331 = pneg %p146
      %p332 = pneg %p143
      %p333 = pneg %p167
      %p334 = pneg %p164
      %p335 = pneg %p195
      %p336 = pneg %p192
      %p337 = scmp.lt.s32.totalorder %s24, 1
      %s338 = scalar_select %p337, %s24, 1
      %p339 = scmp.lt.s32.totalorder %s25, 0
      %s340 = scalar_select %p339, %s25, 0
      %s341 = smul.addr %s338, 4
      %s342 = sadd.s32 %s340, %s341
      %s343 = smul.addr %s342, 4
      %s344 = scalar_lea.vmem %s6, %s343
      %p345 = pneg %p223
      %p346 = pneg %p220
      %p347 = scmp.lt.s32.totalorder %s24, 1
      %s348 = scalar_select %p347, %s24, 1
      %p349 = scmp.lt.s32.totalorder %s25, 0
      %s350 = scalar_select %p349, %s25, 0
      %s351 = smul.addr %s348, 4
      %s352 = sadd.s32 %s350, %s351
      %s353 = smul.addr %s352, 4
      %s354 = scalar_lea.vmem %s7, %s353
      %p355 = pneg %p251
      %p356 = pneg %p248
      %p357 = scmp.lt.s32.totalorder %s24, 1
      %s358 = scalar_select %p357, %s24, 1
      %p359 = scmp.lt.s32.totalorder %s25, 0
      %s360 = scalar_select %p359, %s25, 0
      %s361 = smul.addr %s358, 4
      %s362 = sadd.s32 %s360, %s361
      %s363 = smul.addr %s362, 4
      %s364 = scalar_lea.vmem %s8, %s363
      %p365 = scmp.lt.s32.totalorder %s24, 1
      %s366 = scalar_select %p365, %s24, 1
      %p367 = scmp.lt.s32.totalorder %s25, 0
      %s368 = scalar_select %p367, %s25, 0
      %s369 = sadd.s32 %s368, %s366
      %s370 = smul.addr %s369, 8
      %s371 = scalar_lea.vmem %s0, %s370
      %p372 = scmp.lt.s32.totalorder %s24, 1
      %s373 = scalar_select %p372, %s24, 1
      %p374 = scmp.lt.s32.totalorder %s25, 0
      %s375 = scalar_select %p374, %s25, 0
      %s376 = sadd.s32 %s375, %s373
      %s377 = smul.addr %s376, 4
      %s378 = scalar_lea.vmem %s1, %s377
      %p379 = scmp.lt.s32.totalorder %s24, 1
      %s380 = scalar_select %p379, %s24, 1
      %p381 = scmp.lt.s32.totalorder %s25, 0
      %s382 = scalar_select %p381, %s25, 0
      %s383 = smul.addr %s380, 4
      %s384 = sadd.s32 %s382, %s383
      %s385 = smul.addr %s384, 4
      %s386 = scalar_lea.vmem %s6, %s385
      %p387 = scmp.lt.s32.totalorder %s24, 1
      %s388 = scalar_select %p387, %s24, 1
      %p389 = scmp.lt.s32.totalorder %s25, 0
      %s390 = scalar_select %p389, %s25, 0
      %s391 = smul.addr %s388, 4
      %s392 = sadd.s32 %s390, %s391
      %s393 = smul.addr %s392, 4
      %s394 = scalar_lea.vmem %s7, %s393
      %p395 = scmp.lt.s32.totalorder %s24, 1
      %s396 = scalar_select %p395, %s24, 1
      %p397 = scmp.lt.s32.totalorder %s25, 0
      %s398 = scalar_select %p397, %s25, 0
      %s399 = smul.addr %s396, 4
      %s400 = sadd.s32 %s398, %s399
      %s401 = smul.addr %s400, 4
      %s402 = scalar_lea.vmem %s8, %s401
      %v404 = vld [vmem:[%s371] sm:$0xff]
      %v405 = vld [vmem:[%s378] sm:$0xf]
      %v406 = vunpack.c.l.bf16 %v405
      %v407 = vpack.c.bf16 %v404, %v404
      %v408 = vadd.f32 %v404, %v406
      %v409 = vpack.c.bf16 %v408, %v408
      %v410 = vld [vmem:[%s2] sm:$0xf]
      %v411 = vld [vmem:[%s2 + $0x4] sm:$0xf]
      %v412 = vld [vmem:[%s2 + $0x8] sm:$0xf]
      %v413 = vld [vmem:[%s2 + $0xc] sm:$0xf]
      %v414 = vld [vmem:[%s3] sm:$0x1]
      %v416 = vlaneseq
      %v417 = vshrl.u32 %v416, 7
      %v418 = vsub.s32 0, %v417
      %v419 = vrot.slane %v414, %v418
      %v425 = vunpack.c.l.b16 %v410
      %v426 = vunpack.c.l.b16 %v411
      %v427 = vunpack.c.l.b16 %v412
      %v428 = vunpack.c.l.b16 %v413
      %v429 = vpack.c.b16 %v426, %v425
      %v430 = vpack.c.b16 %v428, %v427
      %vm433 = vcmask 261120
      %v435 = vsel %vm433, %v409, 0
      %437 = vmatprep.subr.bf16.mxu0 0
      %438 = vmatpush1.bf16.msra.mxu0 0
      %439 = vmatprep.subr.bf16.mxu0 0
      %440 = vmatpush1.bf16.msra.mxu0 0
      %441 = vmatprep.subr.bf16.mxu0 0
      %442 = vmatpush1.bf16.msra.mxu0 0
      %443 = vmatprep.subr.bf16.mxu0 0
      %444 = vmatpush1.bf16.msra.mxu0 0
      %445 = vmatprep.subr.bf16.mxu0 0
      %446 = vmatpush1.bf16.msra.mxu0 0
      %447 = vmatprep.subr.bf16.mxu0 0
      %448 = vmatpush1.bf16.msra.mxu0 0
      %449 = vmatprep.subr.bf16.mxu0 0
      %450 = vmatpush1.bf16.msra.mxu0 %v430
      %451 = vmatprep.subr.bf16.mxu0 0
      %452 = vmatpush1.bf16.msra.mxu0 %v429
      %453 = vmatprep.subr.bf16.mxu0 0
      %454 = vmatpush2.bf16.msra.mxu0 0
      %455 = vmatprep.subr.bf16.mxu0 0
      %456 = vmatpush2.bf16.msra.mxu0 0
      %457 = vmatprep.subr.bf16.mxu0 0
      %458 = vmatpush2.bf16.msra.mxu0 0
      %459 = vmatprep.subr.bf16.mxu0 0
      %460 = vmatpush2.bf16.msra.mxu0 0
      %461 = vmatprep.subr.bf16.mxu0 0
      %462 = vmatpush2.bf16.msra.mxu0 0
      %463 = vmatprep.subr.bf16.mxu0 0
      %464 = vmatpush2.bf16.msra.mxu0 0
      %465 = vmatprep.subr.bf16.mxu0 0
      %466 = vmatpush2.bf16.msra.mxu0 0
      %467 = vmatprep.subr.bf16.mxu0 0
      %468 = vmatpush2.bf16.msra.mxu0 0
      %469 = vmatprep.mubr.bf16.mxu0 0
      %470 = vmatmul.mubr.bf16.gmra.mxu0 %v435
      %v471 = vpop.f32.mrf.mxu0
      %v472 = vadd.f32 %v419, %v471
      %v473 = vpop.f32.mrf.mxu0
      %v474 = vpop.f32.mrf.mxu0
      %v475 = vpop.f32.mrf.mxu0
      %476 = vdwg.mxu0
      %v477 = vld [vmem:[%s4] sm:$0xf]
      %v478 = vld [vmem:[%s4 + $0x4] sm:$0xf]
      %v479 = vld [vmem:[%s4 + $0x8] sm:$0xf]
      %v480 = vld [vmem:[%s4 + $0xc] sm:$0xf]
      %v481 = vld [vmem:[%s5] sm:$0x1]
      %v483 = vlaneseq
      %v484 = vshrl.u32 %v483, 7
      %v485 = vsub.s32 0, %v484
      %v486 = vrot.slane %v481, %v485
      %v492 = vunpack.c.l.b16 %v477
      %v493 = vunpack.c.l.b16 %v478
      %v494 = vunpack.c.l.b16 %v479
      %v495 = vunpack.c.l.b16 %v480
      %v496 = vpack.c.b16 %v493, %v492
      %v497 = vpack.c.b16 %v495, %v494
      %v501 = vsel %vm433, %v407, 0
      %503 = vmatprep.subr.bf16.mxu0 0
      %504 = vmatpush1.bf16.msra.mxu0 0
      %505 = vmatprep.subr.bf16.mxu0 0
      %506 = vmatpush1.bf16.msra.mxu0 0
      %507 = vmatprep.subr.bf16.mxu0 0
      %508 = vmatpush1.bf16.msra.mxu0 0
      %509 = vmatprep.subr.bf16.mxu0 0
      %510 = vmatpush1.bf16.msra.mxu0 0
      %511 = vmatprep.subr.bf16.mxu0 0
      %512 = vmatpush1.bf16.msra.mxu0 0
      %513 = vmatprep.subr.bf16.mxu0 0
      %514 = vmatpush1.bf16.msra.mxu0 0
      %515 = vmatprep.subr.bf16.mxu0 0
      %516 = vmatpush1.bf16.msra.mxu0 %v497
      %517 = vmatprep.subr.bf16.mxu0 0
      %518 = vmatpush1.bf16.msra.mxu0 %v496
      %519 = vmatprep.subr.bf16.mxu0 0
      %520 = vmatpush2.bf16.msra.mxu0 0
      %521 = vmatprep.subr.bf16.mxu0 0
      %522 = vmatpush2.bf16.msra.mxu0 0
      %523 = vmatprep.subr.bf16.mxu0 0
      %524 = vmatpush2.bf16.msra.mxu0 0
      %525 = vmatprep.subr.bf16.mxu0 0
      %526 = vmatpush2.bf16.msra.mxu0 0
      %527 = vmatprep.subr.bf16.mxu0 0
      %528 = vmatpush2.bf16.msra.mxu0 0
      %529 = vmatprep.subr.bf16.mxu0 0
      %530 = vmatpush2.bf16.msra.mxu0 0
      %531 = vmatprep.subr.bf16.mxu0 0
      %532 = vmatpush2.bf16.msra.mxu0 0
      %533 = vmatprep.subr.bf16.mxu0 0
      %534 = vmatpush2.bf16.msra.mxu0 0
      %535 = vmatprep.mubr.bf16.mxu0 0
      %536 = vmatmul.mubr.bf16.gmra.mxu0 %v501
      %v537 = vpop.f32.mrf.mxu0
      %v538 = vadd.f32 %v486, %v537
      %v539 = vpop.f32.mrf.mxu0
      %v540 = vpop.f32.mrf.mxu0
      %v541 = vpop.f32.mrf.mxu0
      %542 = vdwg.mxu0
      %v543 = vmul.f32 %v472, 0.35355338
      %v544 = vpack.c.bf16 %v543, %v543
      %vm545 = vcmask 60416
      %546 = vst.msk [vmem:[%s386] sm:$0xf] %vm545, %v544
      %v547 = vpack.c.bf16 %v472, %v472
      %v549 = vunpack.c.l.b16 %v547
      %v550 = vpack.c.b16 %v549, %v549
      %551 = vrot.lane.b32.xlu0 %v550, 96
      %v552 = vpop.permute.xlu0 %551
      %554 = vst.msk [vmem:[%s394] sm:$0xf] %vm545, %v552
      %v555 = vpack.c.bf16 %v538, %v538
      %556 = vst.msk [vmem:[%s402] sm:$0xf] %vm545, %v555
      %v558 = vunpack.c.l.b16 %v544
      %v559 = vpack.c.b16 %v558, %v558
      %560 = vrot.lane.b32.xlu0 %v559, 120
      %v561 = vpop.permute.xlu0 %560
      %s563 = scalar_lea.vmem %s386, 4
      %564 = vst.msk [vmem:[%s563] sm:$0xf] %vm545, %v561
      %565 = vrot.lane.b32.xlu0 %v550, 88
      %v566 = vpop.permute.xlu0 %565
      %s568 = scalar_lea.vmem %s394, 4
      %569 = vst.msk [vmem:[%s568] sm:$0xf] %vm545, %v566
      %v571 = vunpack.c.l.b16 %v555
      %v572 = vpack.c.b16 %v571, %v571
      %573 = vrot.lane.b32.xlu0 %v572, 120
      %v574 = vpop.permute.xlu0 %573
      %s576 = scalar_lea.vmem %s402, 4
      %577 = vst.msk [vmem:[%s576] sm:$0xf] %vm545, %v574
      %578 = vrot.lane.b32.xlu0 %v559, 112
      %v579 = vpop.permute.xlu0 %578
      %s581 = scalar_lea.vmem %s386, 8
      %582 = vst.msk [vmem:[%s581] sm:$0xf] %vm545, %v579
      %583 = vrot.lane.b32.xlu0 %v550, 80
      %v584 = vpop.permute.xlu0 %583
      %s586 = scalar_lea.vmem %s394, 8
      %587 = vst.msk [vmem:[%s586] sm:$0xf] %vm545, %v584
      %588 = vrot.lane.b32.xlu0 %v572, 112
      %v589 = vpop.permute.xlu0 %588
      %s591 = scalar_lea.vmem %s402, 8
      %592 = vst.msk [vmem:[%s591] sm:$0xf] %vm545, %v589
      %593 = vrot.lane.b32.xlu0 %v559, 104
      %v594 = vpop.permute.xlu0 %593
      %s596 = scalar_lea.vmem %s386, 12
      %597 = vst.msk [vmem:[%s596] sm:$0xf] %vm545, %v594
      %598 = vrot.lane.b32.xlu0 %v550, 72
      %v599 = vpop.permute.xlu0 %598
      %s601 = scalar_lea.vmem %s394, 12
      %602 = vst.msk [vmem:[%s601] sm:$0xf] %vm545, %v599
      %603 = vrot.lane.b32.xlu0 %v572, 104
      %v604 = vpop.permute.xlu0 %603
      %s606 = scalar_lea.vmem %s402, 12
      %607 = vst.msk [vmem:[%s606] sm:$0xf] %vm545, %v604
      %p608 = scmp.lt.s32.totalorder %s24, 1
      %s609 = scalar_select %p608, %s24, 1
      %p610 = scmp.lt.s32.totalorder %s25, 0
      %s611 = scalar_select %p610, %s25, 0
      %s612 = smul.addr %s609, 4
      %s613 = sadd.s32 %s611, %s612
      %s614 = smul.addr %s613, 4
      %s615 = scalar_lea.vmem %s6, %s614
      %p616 = scmp.lt.s32.totalorder %s24, 1
      %s617 = scalar_select %p616, %s24, 1
      %p618 = scmp.lt.s32.totalorder %s25, 0
      %s619 = scalar_select %p618, %s25, 0
      %s620 = smul.addr %s617, 4
      %s621 = sadd.s32 %s619, %s620
      %s622 = smul.addr %s621, 4
      %s623 = scalar_lea.vmem %s7, %s622
      %p624 = scmp.lt.s32.totalorder %s24, 1
      %s625 = scalar_select %p624, %s24, 1
      %p626 = scmp.lt.s32.totalorder %s25, 0
      %s627 = scalar_select %p626, %s25, 0
      %s628 = smul.addr %s625, 4
      %s629 = sadd.s32 %s627, %s628
      %s630 = smul.addr %s629, 4
      %s631 = scalar_lea.vmem %s8, %s630
      // Predicated region
      $region45: #{transformer_encoder.4} parent=43 // pred_check
        %p632 = pneg %p192
      $region46: #{transformer_encoder.4} parent=43 // pred_check_branch
        %634 = sbr.rel (%p632) target = $region48
      $region47: #{transformer_encoder.4} parent=43 // pred_region
        _
      $region48: #{transformer_encoder.4} parent=43 // pred_fallthru
        _
      // Predicated region
      $region49: #{transformer_encoder.4} parent=43 // pred_check
        %p635 = pneg %p220
      $region50: #{transformer_encoder.4} parent=43 // pred_check_branch
        %637 = sbr.rel (%p635) target = $region52
      $region51: #{transformer_encoder.4} parent=43 // pred_region
        _
      $region52: #{transformer_encoder.4} parent=43 // pred_fallthru
        _
      // Predicated region
      $region53: #{transformer_encoder.4} parent=43 // pred_check
        %p638 = pneg %p248
      $region54: #{transformer_encoder.4} parent=43 // pred_check_branch
        %640 = sbr.rel (%p638) target = $region56
      $region55: #{transformer_encoder.4} parent=43 // pred_region
        _
      $region56: #{transformer_encoder.4} parent=43 // pred_fallthru
        _
    $region44: #{transformer_encoder.4} parent=5 // pred_fallthru
      _
    %p641 = scmp.le.s32.totalorder 2, %s15
    // Predicated region
    $region57: #{transformer_encoder.4} parent=5 // pred_check
      %p642 = pneg %p641
    $region58: #{transformer_encoder.4} parent=5 // pred_check_branch
      %644 = sbr.rel (%p642) target = $region60
    $region59: #{transformer_encoder.4} parent=5 // pred_region
      %s645 = ssub.s32 %s15, 2
      // Predicated region
      $region61: #{transformer_encoder.4} parent=59 // pred_check
        %p646 = pneg %p198
      $region62: #{transformer_encoder.4} parent=59 // pred_check_branch
        %648 = sbr.rel (%p646) target = $region64
      $region63: #{transformer_encoder.4} parent=59 // pred_region
        %p649 = scmp.lt.s32.totalorder %s26, 1
        %s650 = scalar_select %p649, %s26, 1
        %p651 = scmp.lt.s32.totalorder %s27, 0
        %s652 = scalar_select %p651, %s27, 0
        %s653 = smul.addr %s650, 4
        %s654 = sadd.s32 %s652, %s653
        %s655 = smul.addr %s654, 4
        %s656 = scalar_lea.vmem %s6, %s655
      $region64: #{transformer_encoder.4} parent=59 // pred_fallthru
        _
      // Predicated region
      $region65: #{transformer_encoder.4} parent=59 // pred_check
        %p657 = pneg %p226
      $region66: #{transformer_encoder.4} parent=59 // pred_check_branch
        %659 = sbr.rel (%p657) target = $region68
      $region67: #{transformer_encoder.4} parent=59 // pred_region
        %p660 = scmp.lt.s32.totalorder %s26, 1
        %s661 = scalar_select %p660, %s26, 1
        %p662 = scmp.lt.s32.totalorder %s27, 0
        %s663 = scalar_select %p662, %s27, 0
        %s664 = smul.addr %s661, 4
        %s665 = sadd.s32 %s663, %s664
        %s666 = smul.addr %s665, 4
        %s667 = scalar_lea.vmem %s7, %s666
      $region68: #{transformer_encoder.4} parent=59 // pred_fallthru
        _
      // Predicated region
      $region69: #{transformer_encoder.4} parent=59 // pred_check
        %p668 = pneg %p254
      $region70: #{transformer_encoder.4} parent=59 // pred_check_branch
        %670 = sbr.rel (%p668) target = $region72
      $region71: #{transformer_encoder.4} parent=59 // pred_region
        %p671 = scmp.lt.s32.totalorder %s26, 1
        %s672 = scalar_select %p671, %s26, 1
        %p673 = scmp.lt.s32.totalorder %s27, 0
        %s674 = scalar_select %p673, %s27, 0
        %s675 = smul.addr %s672, 4
        %s676 = sadd.s32 %s674, %s675
        %s677 = smul.addr %s676, 4
        %s678 = scalar_lea.vmem %s8, %s677
      $region72: #{transformer_encoder.4} parent=59 // pred_fallthru
        _
    $region60: #{transformer_encoder.4} parent=5 // pred_fallthru
      _
  $region6: #{transformer_encoder.4} parent=0 // loop_footer
    %s19 = sadd.s32 1, %s15
  $region7: #{transformer_encoder.4} parent=0 // loop_footer_branch
    %14 = sbr.rel target = $region3
  $region8: #{transformer_encoder.4} parent=0 // loop_exit
    _

// kernel: transformer_encoder.5
$region0: #{transformer_encoder.5}
  #allocation0 [shape = 'u32[]', space=smem, size = 0x4, offset = 0x4, fixed_abs, tag = 'smem constant byte address 0x4 - core index']
  #allocation1 [shape = 'u32[144,128]{1,0:T(1,128)}', space=vmem, size = 0x12000, scoped, tag = 'internal scratch']
  #allocation2 [shape = 'f32[8,32]{1,0:T(8,128)}', space=vmem, size = 0x1000, scoped, tag = 'scratch operand']
  %s0 = inlined_call_operand.vmem [shape: f32[2,8,32], index: 0, kind: input, shape index: {}]
  %s1 = inlined_call_operand.vmem [shape: bf16[2,4,8,8], index: 1, kind: input, shape index: {}]
  %s2 = inlined_call_operand.vmem [shape: bf16[2,4,8,8], index: 2, kind: input, shape index: {}]
  %s3 = inlined_call_operand.vmem [shape: bf16[2,4,8,8], index: 3, kind: input, shape index: {}]
  %s4 = inlined_call_operand.vmem [shape: bf16[32,32], index: 4, kind: input, shape index: {}]
  %s5 = inlined_call_operand.vmem [shape: f32[1,32], index: 5, kind: input, shape index: {}]
  %s6 = inlined_call_operand.vmem [shape: f32[1,32], index: 6, kind: input, shape index: {}]
  %s7 = inlined_call_operand.vmem [shape: f32[1,32], index: 7, kind: input, shape index: {}]
  %s8 = inlined_call_operand.vmem [shape: bf16[32,64], index: 8, kind: input, shape index: {}]
  %s9 = inlined_call_operand.vmem [shape: f32[1,64], index: 9, kind: input, shape index: {}]
  %s10 = inlined_call_operand.vmem [shape: bf16[64,32], index: 10, kind: input, shape index: {}]
  %s11 = inlined_call_operand.vmem [shape: f32[1,32], index: 11, kind: input, shape index: {}]
  %s12 = inlined_call_operand.vmem [shape: f32[1,32], index: 12, kind: input, shape index: {}]
  %s13 = inlined_call_operand.vmem [shape: f32[1,32], index: 13, kind: input, shape index: {}]
  %s14 = inlined_call_operand.vmem [shape: f32[2,8,32], index: 14, kind: output, shape index: {}]
  %s15 = sld [smem:[#allocation0]]
  $region89: #{transformer_encoder.5} parent=0
    _
  %s17 = ssub.s32 1, %s15
  %s18 = scalar_select 0, %s17, %s15
  loop: start=0, step=1, limit=4
  $region2: #{transformer_encoder.5} parent=0 // loop_pre_header
    _
  $region3: #{transformer_encoder.5} parent=0 // loop_header
    %s20 = sphi 0, %s24
    %p21 = scmp.ge.s32.totalorder %s20, 4
    %s27 = sphi 0, %s39
    %s28 = sphi 0, %s35
    %s29 = sphi 0, %s27
    %s30 = sphi 0, %s28
    %s31 = sphi 0, %s29
    %s32 = sphi 0, %s30
    %s44 = sphi 0, %s46
    %s47 = sphi 0, %s44
    %s48 = sphi 0, %s47
    %s64 = sphi 0, %s48
    %s72 = sphi 0, %s74
    %s75 = sphi 0, %s72
    %s76 = sphi 0, %s75
    %s92 = sphi 0, %s76
    %s98 = sphi 0, %s100
    %s101 = sphi 0, %s98
    %s102 = sphi 0, %s101
    %s118 = sphi 0, %s102
    %s124 = sphi 0, %s126
    %s127 = sphi 0, %s124
    %s128 = sphi 0, %s127
    %s144 = sphi 0, %s128
    %s148 = sphi 0, %s148
    %s150 = sphi 0, %s148
    %s151 = sphi 0, %s150
    %s165 = sphi 0, %s151
    %s169 = sphi 0, %s169
    %s171 = sphi 0, %s169
    %s172 = sphi 0, %s171
    %s186 = sphi 0, %s172
    %s190 = sphi 0, %s190
    %s192 = sphi 0, %s190
    %s193 = sphi 0, %s192
    %s207 = sphi 0, %s193
    %s211 = sphi 0, %s211
    %s213 = sphi 0, %s211
    %s214 = sphi 0, %s213
    %s228 = sphi 0, %s214
    %s232 = sphi 0, %s232
    %s234 = sphi 0, %s232
    %s235 = sphi 0, %s234
    %s249 = sphi 0, %s235
    %s253 = sphi 0, %s253
    %s255 = sphi 0, %s253
    %s256 = sphi 0, %s255
    %s270 = sphi 0, %s256
    %s274 = sphi 0, %s274
    %s276 = sphi 0, %s274
    %s277 = sphi 0, %s276
    %s291 = sphi 0, %s277
    %s295 = sphi 0, %s295
    %s297 = sphi 0, %s295
    %s298 = sphi 0, %s297
    %s312 = sphi 0, %s298
    %s316 = sphi 0, %s316
    %s318 = sphi 0, %s316
    %s319 = sphi 0, %s318
    %s333 = sphi 0, %s319
    %s337 = sphi 0, %s337
    %s339 = sphi 0, %s337
    %s340 = sphi 0, %s339
    %s354 = sphi 0, %s340
    %s362 = sphi 0, %s364
    %s365 = sphi 0, %s362
    %s366 = sphi 0, %s365
    %s382 = sphi 0, %s366
  $region4: #{transformer_encoder.5} parent=0 // loop_header_branch
    %23 = sbr.rel (%p21) target = $region8
  $region5: #{transformer_encoder.5} parent=0 // loop_body
    %s25 = ssub.s32 %s20, 1
    %s26 = ssub.s32 %s20, 2
    %s33 = sadd.s32 1, %s28
    %p34 = scmp.ge.s32.totalorder %s33, 1
    %s35 = scalar_select %p34, 0, %s33
    %s36 = sadd.s32 1, %s27
    %s37 = scalar_select %p34, %s36, %s27
    %p38 = scmp.ge.s32.totalorder %s37, 2
    %s39 = scalar_select %p38, 0, %s37
    %s40 = ssub.s32 %s27, %s39
    %s41 = ssub.s32 %s28, %s35
    %s42 = sor.u32 %s40, %s41
    %p43 = scmp.eq.s32.totalorder %s42, 0
    %s45 = sadd.s32 %s44, 1
    %s46 = scalar_select %p43, %s44, %s45
    %p49 = pneg %p43
    %p50 = scmp.eq.s32.totalorder %s20, 1
    %p51 = por %p49, %p50
    %p52 = scmp.ne.s32.totalorder %s44, %s47
    %p53 = scmp.eq.s32.totalorder %s20, 0
    %p54 = por %p52, %p53
    %p55 = scmp.ne.s32.totalorder %s44, %s47
    %p56 = scmp.eq.s32.totalorder %s25, 1
    %p57 = por %p55, %p56
    %p58 = scmp.ne.s32.totalorder %s47, %s48
    %p59 = scmp.eq.s32.totalorder %s25, 0
    %p60 = por %p58, %p59
    %p61 = scmp.ne.s32.totalorder %s47, %s48
    %p62 = scmp.eq.s32.totalorder %s26, 1
    %p63 = por %p61, %p62
    %p65 = scmp.ne.s32.totalorder %s48, %s64
    %p66 = scmp.eq.s32.totalorder %s26, 0
    %p67 = por %p65, %p66
    %s68 = ssub.s32 %s27, %s39
    %s69 = ssub.s32 %s28, %s35
    %s70 = sor.u32 %s68, %s69
    %p71 = scmp.eq.s32.totalorder %s70, 0
    %s73 = sadd.s32 %s72, 1
    %s74 = scalar_select %p71, %s72, %s73
    %p77 = pneg %p71
    %p78 = scmp.eq.s32.totalorder %s20, 1
    %p79 = por %p77, %p78
    %p80 = scmp.ne.s32.totalorder %s72, %s75
    %p81 = scmp.eq.s32.totalorder %s20, 0
    %p82 = por %p80, %p81
    %p83 = scmp.ne.s32.totalorder %s72, %s75
    %p84 = scmp.eq.s32.totalorder %s25, 1
    %p85 = por %p83, %p84
    %p86 = scmp.ne.s32.totalorder %s75, %s76
    %p87 = scmp.eq.s32.totalorder %s25, 0
    %p88 = por %p86, %p87
    %p89 = scmp.ne.s32.totalorder %s75, %s76
    %p90 = scmp.eq.s32.totalorder %s26, 1
    %p91 = por %p89, %p90
    %p93 = scmp.ne.s32.totalorder %s76, %s92
    %p94 = scmp.eq.s32.totalorder %s26, 0
    %p95 = por %p93, %p94
    %s96 = ssub.s32 %s27, %s39
    %p97 = scmp.eq.s32.totalorder %s96, 0
    %s99 = sadd.s32 %s98, 1
    %s100 = scalar_select %p97, %s98, %s99
    %p103 = pneg %p97
    %p104 = scmp.eq.s32.totalorder %s20, 1
    %p105 = por %p103, %p104
    %p106 = scmp.ne.s32.totalorder %s98, %s101
    %p107 = scmp.eq.s32.totalorder %s20, 0
    %p108 = por %p106, %p107
    %p109 = scmp.ne.s32.totalorder %s98, %s101
    %p110 = scmp.eq.s32.totalorder %s25, 1
    %p111 = por %p109, %p110
    %p112 = scmp.ne.s32.totalorder %s101, %s102
    %p113 = scmp.eq.s32.totalorder %s25, 0
    %p114 = por %p112, %p113
    %p115 = scmp.ne.s32.totalorder %s101, %s102
    %p116 = scmp.eq.s32.totalorder %s26, 1
    %p117 = por %p115, %p116
    %p119 = scmp.ne.s32.totalorder %s102, %s118
    %p120 = scmp.eq.s32.totalorder %s26, 0
    %p121 = por %p119, %p120
    %s122 = ssub.s32 %s27, %s39
    %p123 = scmp.eq.s32.totalorder %s122, 0
    %s125 = sadd.s32 %s124, 1
    %s126 = scalar_select %p123, %s124, %s125
    %p129 = pneg %p123
    %p130 = scmp.eq.s32.totalorder %s20, 1
    %p131 = por %p129, %p130
    %p132 = scmp.ne.s32.totalorder %s124, %s127
    %p133 = scmp.eq.s32.totalorder %s20, 0
    %p134 = por %p132, %p133
    %p135 = scmp.ne.s32.totalorder %s124, %s127
    %p136 = scmp.eq.s32.totalorder %s25, 1
    %p137 = por %p135, %p136
    %p138 = scmp.ne.s32.totalorder %s127, %s128
    %p139 = scmp.eq.s32.totalorder %s25, 0
    %p140 = por %p138, %p139
    %p141 = scmp.ne.s32.totalorder %s127, %s128
    %p142 = scmp.eq.s32.totalorder %s26, 1
    %p143 = por %p141, %p142
    %p145 = scmp.ne.s32.totalorder %s128, %s144
    %p146 = scmp.eq.s32.totalorder %s26, 0
    %p147 = por %p145, %p146
    %s149 = sadd.s32 %s148, 1
    %p152 = scmp.eq.s32.totalorder %s20, 1
    %p153 = scmp.ne.s32.totalorder %s148, %s150
    %p154 = scmp.eq.s32.totalorder %s20, 0
    %p155 = por %p153, %p154
    %p156 = scmp.ne.s32.totalorder %s148, %s150
    %p157 = scmp.eq.s32.totalorder %s25, 1
    %p158 = por %p156, %p157
    %p159 = scmp.ne.s32.totalorder %s150, %s151
    %p160 = scmp.eq.s32.totalorder %s25, 0
    %p161 = por %p159, %p160
    %p162 = scmp.ne.s32.totalorder %s150, %s151
    %p163 = scmp.eq.s32.totalorder %s26, 1
    %p164 = por %p162, %p163
    %p166 = scmp.ne.s32.totalorder %s151, %s165
    %p167 = scmp.eq.s32.totalorder %s26, 0
    %p168 = por %p166, %p167
    %s170 = sadd.s32 %s169, 1
    %p173 = scmp.eq.s32.totalorder %s20, 1
    %p174 = scmp.ne.s32.totalorder %s169, %s171
    %p175 = scmp.eq.s32.totalorder %s20, 0
    %p176 = por %p174, %p175
    %p177 = scmp.ne.s32.totalorder %s169, %s171
    %p178 = scmp.eq.s32.totalorder %s25, 1
    %p179 = por %p177, %p178
    %p180 = scmp.ne.s32.totalorder %s171, %s172
    %p181 = scmp.eq.s32.totalorder %s25, 0
    %p182 = por %p180, %p181
    %p183 = scmp.ne.s32.totalorder %s171, %s172
    %p184 = scmp.eq.s32.totalorder %s26, 1
    %p185 = por %p183, %p184
    %p187 = scmp.ne.s32.totalorder %s172, %s186
    %p188 = scmp.eq.s32.totalorder %s26, 0
    %p189 = por %p187, %p188
    %s191 = sadd.s32 %s190, 1
    %p194 = scmp.eq.s32.totalorder %s20, 1
    %p195 = scmp.ne.s32.totalorder %s190, %s192
    %p196 = scmp.eq.s32.totalorder %s20, 0
    %p197 = por %p195, %p196
    %p198 = scmp.ne.s32.totalorder %s190, %s192
    %p199 = scmp.eq.s32.totalorder %s25, 1
    %p200 = por %p198, %p199
    %p201 = scmp.ne.s32.totalorder %s192, %s193
    %p202 = scmp.eq.s32.totalorder %s25, 0
    %p203 = por %p201, %p202
    %p204 = scmp.ne.s32.totalorder %s192, %s193
    %p205 = scmp.eq.s32.totalorder %s26, 1
    %p206 = por %p204, %p205
    %p208 = scmp.ne.s32.totalorder %s193, %s207
    %p209 = scmp.eq.s32.totalorder %s26, 0
    %p210 = por %p208, %p209
    %s212 = sadd.s32 %s211, 1
    %p215 = scmp.eq.s32.totalorder %s20, 1
    %p216 = scmp.ne.s32.totalorder %s211, %s213
    %p217 = scmp.eq.s32.totalorder %s20, 0
    %p218 = por %p216, %p217
    %p219 = scmp.ne.s32.totalorder %s211, %s213
    %p220 = scmp.eq.s32.totalorder %s25, 1
    %p221 = por %p219, %p220
    %p222 = scmp.ne.s32.totalorder %s213, %s214
    %p223 = scmp.eq.s32.totalorder %s25, 0
    %p224 = por %p222, %p223
    %p225 = scmp.ne.s32.totalorder %s213, %s214
    %p226 = scmp.eq.s32.totalorder %s26, 1
    %p227 = por %p225, %p226
    %p229 = scmp.ne.s32.totalorder %s214, %s228
    %p230 = scmp.eq.s32.totalorder %s26, 0
    %p231 = por %p229, %p230
    %s233 = sadd.s32 %s232, 1
    %p236 = scmp.eq.s32.totalorder %s20, 1
    %p237 = scmp.ne.s32.totalorder %s232, %s234
    %p238 = scmp.eq.s32.totalorder %s20, 0
    %p239 = por %p237, %p238
    %p240 = scmp.ne.s32.totalorder %s232, %s234
    %p241 = scmp.eq.s32.totalorder %s25, 1
    %p242 = por %p240, %p241
    %p243 = scmp.ne.s32.totalorder %s234, %s235
    %p244 = scmp.eq.s32.totalorder %s25, 0
    %p245 = por %p243, %p244
    %p246 = scmp.ne.s32.totalorder %s234, %s235
    %p247 = scmp.eq.s32.totalorder %s26, 1
    %p248 = por %p246, %p247
    %p250 = scmp.ne.s32.totalorder %s235, %s249
    %p251 = scmp.eq.s32.totalorder %s26, 0
    %p252 = por %p250, %p251
    %s254 = sadd.s32 %s253, 1
    %p257 = scmp.eq.s32.totalorder %s20, 1
    %p258 = scmp.ne.s32.totalorder %s253, %s255
    %p259 = scmp.eq.s32.totalorder %s20, 0
    %p260 = por %p258, %p259
    %p261 = scmp.ne.s32.totalorder %s253, %s255
    %p262 = scmp.eq.s32.totalorder %s25, 1
    %p263 = por %p261, %p262
    %p264 = scmp.ne.s32.totalorder %s255, %s256
    %p265 = scmp.eq.s32.totalorder %s25, 0
    %p266 = por %p264, %p265
    %p267 = scmp.ne.s32.totalorder %s255, %s256
    %p268 = scmp.eq.s32.totalorder %s26, 1
    %p269 = por %p267, %p268
    %p271 = scmp.ne.s32.totalorder %s256, %s270
    %p272 = scmp.eq.s32.totalorder %s26, 0
    %p273 = por %p271, %p272
    %s275 = sadd.s32 %s274, 1
    %p278 = scmp.eq.s32.totalorder %s20, 1
    %p279 = scmp.ne.s32.totalorder %s274, %s276
    %p280 = scmp.eq.s32.totalorder %s20, 0
    %p281 = por %p279, %p280
    %p282 = scmp.ne.s32.totalorder %s274, %s276
    %p283 = scmp.eq.s32.totalorder %s25, 1
    %p284 = por %p282, %p283
    %p285 = scmp.ne.s32.totalorder %s276, %s277
    %p286 = scmp.eq.s32.totalorder %s25, 0
    %p287 = por %p285, %p286
    %p288 = scmp.ne.s32.totalorder %s276, %s277
    %p289 = scmp.eq.s32.totalorder %s26, 1
    %p290 = por %p288, %p289
    %p292 = scmp.ne.s32.totalorder %s277, %s291
    %p293 = scmp.eq.s32.totalorder %s26, 0
    %p294 = por %p292, %p293
    %s296 = sadd.s32 %s295, 1
    %p299 = scmp.eq.s32.totalorder %s20, 1
    %p300 = scmp.ne.s32.totalorder %s295, %s297
    %p301 = scmp.eq.s32.totalorder %s20, 0
    %p302 = por %p300, %p301
    %p303 = scmp.ne.s32.totalorder %s295, %s297
    %p304 = scmp.eq.s32.totalorder %s25, 1
    %p305 = por %p303, %p304
    %p306 = scmp.ne.s32.totalorder %s297, %s298
    %p307 = scmp.eq.s32.totalorder %s25, 0
    %p308 = por %p306, %p307
    %p309 = scmp.ne.s32.totalorder %s297, %s298
    %p310 = scmp.eq.s32.totalorder %s26, 1
    %p311 = por %p309, %p310
    %p313 = scmp.ne.s32.totalorder %s298, %s312
    %p314 = scmp.eq.s32.totalorder %s26, 0
    %p315 = por %p313, %p314
    %s317 = sadd.s32 %s316, 1
    %p320 = scmp.eq.s32.totalorder %s20, 1
    %p321 = scmp.ne.s32.totalorder %s316, %s318
    %p322 = scmp.eq.s32.totalorder %s20, 0
    %p323 = por %p321, %p322
    %p324 = scmp.ne.s32.totalorder %s316, %s318
    %p325 = scmp.eq.s32.totalorder %s25, 1
    %p326 = por %p324, %p325
    %p327 = scmp.ne.s32.totalorder %s318, %s319
    %p328 = scmp.eq.s32.totalorder %s25, 0
    %p329 = por %p327, %p328
    %p330 = scmp.ne.s32.totalorder %s318, %s319
    %p331 = scmp.eq.s32.totalorder %s26, 1
    %p332 = por %p330, %p331
    %p334 = scmp.ne.s32.totalorder %s319, %s333
    %p335 = scmp.eq.s32.totalorder %s26, 0
    %p336 = por %p334, %p335
    %s338 = sadd.s32 %s337, 1
    %p341 = scmp.eq.s32.totalorder %s20, 1
    %p342 = scmp.ne.s32.totalorder %s337, %s339
    %p343 = scmp.eq.s32.totalorder %s20, 0
    %p344 = por %p342, %p343
    %p345 = scmp.ne.s32.totalorder %s337, %s339
    %p346 = scmp.eq.s32.totalorder %s25, 1
    %p347 = por %p345, %p346
    %p348 = scmp.ne.s32.totalorder %s339, %s340
    %p349 = scmp.eq.s32.totalorder %s25, 0
    %p350 = por %p348, %p349
    %p351 = scmp.ne.s32.totalorder %s339, %s340
    %p352 = scmp.eq.s32.totalorder %s26, 1
    %p353 = por %p351, %p352
    %p355 = scmp.ne.s32.totalorder %s340, %s354
    %p356 = scmp.eq.s32.totalorder %s26, 0
    %p357 = por %p355, %p356
    %s358 = ssub.s32 %s27, %s39
    %s359 = ssub.s32 %s28, %s35
    %s360 = sor.u32 %s358, %s359
    %p361 = scmp.eq.s32.totalorder %s360, 0
    %s363 = sadd.s32 %s362, 1
    %s364 = scalar_select %p361, %s362, %s363
    %p367 = pneg %p361
    %p368 = scmp.eq.s32.totalorder %s20, 1
    %p369 = por %p367, %p368
    %p370 = scmp.ne.s32.totalorder %s362, %s365
    %p371 = scmp.eq.s32.totalorder %s20, 0
    %p372 = por %p370, %p371
    %p373 = scmp.ne.s32.totalorder %s362, %s365
    %p374 = scmp.eq.s32.totalorder %s25, 1
    %p375 = por %p373, %p374
    %p376 = scmp.ne.s32.totalorder %s365, %s366
    %p377 = scmp.eq.s32.totalorder %s25, 0
    %p378 = por %p376, %p377
    %p379 = scmp.ne.s32.totalorder %s365, %s366
    %p380 = scmp.eq.s32.totalorder %s26, 1
    %p381 = por %p379, %p380
    %p383 = scmp.ne.s32.totalorder %s366, %s382
    %p384 = scmp.eq.s32.totalorder %s26, 0
    %p385 = por %p383, %p384
    %p386 = scmp.le.s32.totalorder 1, %s20
    %p387 = scmp.lt.s32.totalorder %s20, 3
    %p388 = pnand %p386, %p387
    %p389 = pneg %p388
    // Predicated region
    $region9: #{transformer_encoder.5} parent=5 // pred_check
      _
    $region10: #{transformer_encoder.5} parent=5 // pred_check_branch
      %391 = sbr.rel (%p388) target = $region12
    $region11: #{transformer_encoder.5} parent=5 // pred_region
      %s392 = ssub.s32 %s20, 1
      // Predicated region
      $region13: #{transformer_encoder.5} parent=11 // pred_check
        %p393 = pneg %p161
      $region14: #{transformer_encoder.5} parent=11 // pred_check_branch
        %395 = sbr.rel (%p393) target = $region16
      $region15: #{transformer_encoder.5} parent=11 // pred_region
        _
      $region16: #{transformer_encoder.5} parent=11 // pred_fallthru
        _
      // Predicated region
      $region17: #{transformer_encoder.5} parent=11 // pred_check
        %p396 = pneg %p182
      $region18: #{transformer_encoder.5} parent=11 // pred_check_branch
        %398 = sbr.rel (%p396) target = $region20
      $region19: #{transformer_encoder.5} parent=11 // pred_region
        _
      $region20: #{transformer_encoder.5} parent=11 // pred_fallthru
        _
      // Predicated region
      $region21: #{transformer_encoder.5} parent=11 // pred_check
        %p399 = pneg %p203
      $region22: #{transformer_encoder.5} parent=11 // pred_check_branch
        %401 = sbr.rel (%p399) target = $region24
      $region23: #{transformer_encoder.5} parent=11 // pred_region
        _
      $region24: #{transformer_encoder.5} parent=11 // pred_fallthru
        _
      // Predicated region
      $region25: #{transformer_encoder.5} parent=11 // pred_check
        %p402 = pneg %p224
      $region26: #{transformer_encoder.5} parent=11 // pred_check_branch
        %404 = sbr.rel (%p402) target = $region28
      $region27: #{transformer_encoder.5} parent=11 // pred_region
        _
      $region28: #{transformer_encoder.5} parent=11 // pred_fallthru
        _
      // Predicated region
      $region29: #{transformer_encoder.5} parent=11 // pred_check
        %p405 = pneg %p245
      $region30: #{transformer_encoder.5} parent=11 // pred_check_branch
        %407 = sbr.rel (%p405) target = $region32
      $region31: #{transformer_encoder.5} parent=11 // pred_region
        _
      $region32: #{transformer_encoder.5} parent=11 // pred_fallthru
        _
      // Predicated region
      $region33: #{transformer_encoder.5} parent=11 // pred_check
        %p408 = pneg %p266
      $region34: #{transformer_encoder.5} parent=11 // pred_check_branch
        %410 = sbr.rel (%p408) target = $region36
      $region35: #{transformer_encoder.5} parent=11 // pred_region
        _
      $region36: #{transformer_encoder.5} parent=11 // pred_fallthru
        _
      // Predicated region
      $region37: #{transformer_encoder.5} parent=11 // pred_check
        %p411 = pneg %p287
      $region38: #{transformer_encoder.5} parent=11 // pred_check_branch
        %413 = sbr.rel (%p411) target = $region40
      $region39: #{transformer_encoder.5} parent=11 // pred_region
        _
      $region40: #{transformer_encoder.5} parent=11 // pred_fallthru
        _
      // Predicated region
      $region41: #{transformer_encoder.5} parent=11 // pred_check
        %p414 = pneg %p308
      $region42: #{transformer_encoder.5} parent=11 // pred_check_branch
        %416 = sbr.rel (%p414) target = $region44
      $region43: #{transformer_encoder.5} parent=11 // pred_region
        _
      $region44: #{transformer_encoder.5} parent=11 // pred_fallthru
        _
      // Predicated region
      $region45: #{transformer_encoder.5} parent=11 // pred_check
        %p417 = pneg %p329
      $region46: #{transformer_encoder.5} parent=11 // pred_check_branch
        %419 = sbr.rel (%p417) target = $region48
      $region47: #{transformer_encoder.5} parent=11 // pred_region
        _
      $region48: #{transformer_encoder.5} parent=11 // pred_fallthru
        _
      // Predicated region
      $region49: #{transformer_encoder.5} parent=11 // pred_check
        %p420 = pneg %p350
      $region50: #{transformer_encoder.5} parent=11 // pred_check_branch
        %422 = sbr.rel (%p420) target = $region52
      $region51: #{transformer_encoder.5} parent=11 // pred_region
        _
      $region52: #{transformer_encoder.5} parent=11 // pred_fallthru
        _
    $region12: #{transformer_encoder.5} parent=5 // pred_fallthru
      _
    %p423 = scmp.lt.s32.totalorder %s20, 2
    // Predicated region
    $region53: #{transformer_encoder.5} parent=5 // pred_check
      %p424 = pneg %p423
    $region54: #{transformer_encoder.5} parent=5 // pred_check_branch
      %426 = sbr.rel (%p424) target = $region56
    $region55: #{transformer_encoder.5} parent=5 // pred_region
      // Predicated region
      $region57: #{transformer_encoder.5} parent=55 // pred_check
        %p427 = pneg %p54
      $region58: #{transformer_encoder.5} parent=55 // pred_check_branch
        %429 = sbr.rel (%p427) target = $region60
      $region59: #{transformer_encoder.5} parent=55 // pred_region
        %p430 = scmp.lt.s32.totalorder %s27, 1
        %s431 = scalar_select %p430, %s27, 1
        %p432 = scmp.lt.s32.totalorder %s28, 0
        %s433 = scalar_select %p432, %s28, 0
        %s434 = sadd.s32 %s433, %s431
        %s435 = smul.addr %s434, 8
        %s436 = scalar_lea.vmem %s0, %s435
      $region60: #{transformer_encoder.5} parent=55 // pred_fallthru
        _
      // Predicated region
      $region61: #{transformer_encoder.5} parent=55 // pred_check
        %p437 = pneg %p82
      $region62: #{transformer_encoder.5} parent=55 // pred_check_branch
        %439 = sbr.rel (%p437) target = $region64
      $region63: #{transformer_encoder.5} parent=55 // pred_region
        %p440 = scmp.lt.s32.totalorder %s27, 1
        %s441 = scalar_select %p440, %s27, 1
        %p442 = scmp.lt.s32.totalorder %s28, 0
        %s443 = scalar_select %p442, %s28, 0
        %s444 = smul.addr %s441, 4
        %s445 = sadd.s32 %s443, %s444
        %s446 = smul.addr %s445, 4
        %s447 = scalar_lea.vmem %s1, %s446
      $region64: #{transformer_encoder.5} parent=55 // pred_fallthru
        _
      // Predicated region
      $region65: #{transformer_encoder.5} parent=55 // pred_check
        %p448 = pneg %p108
      $region66: #{transformer_encoder.5} parent=55 // pred_check_branch
        %450 = sbr.rel (%p448) target = $region68
      $region67: #{transformer_encoder.5} parent=55 // pred_region
        %p451 = scmp.lt.s32.totalorder %s27, 1
        %s452 = scalar_select %p451, %s27, 1
        %s453 = smul.addr %s452, 4
        %s454 = smul.addr %s453, 4
        %s455 = scalar_lea.vmem %s2, %s454
      $region68: #{transformer_encoder.5} parent=55 // pred_fallthru
        _
      // Predicated region
      $region69: #{transformer_encoder.5} parent=55 // pred_check
        %p456 = pneg %p134
      $region70: #{transformer_encoder.5} parent=55 // pred_check_branch
        %458 = sbr.rel (%p456) target = $region72
      $region71: #{transformer_encoder.5} parent=55 // pred_region
        %p459 = scmp.lt.s32.totalorder %s27, 1
        %s460 = scalar_select %p459, %s27, 1
        %s461 = smul.addr %s460, 4
        %s462 = smul.addr %s461, 4
        %s463 = scalar_lea.vmem %s3, %s462
      $region72: #{transformer_encoder.5} parent=55 // pred_fallthru
        _
    $region56: #{transformer_encoder.5} parent=5 // pred_fallthru
      _
    %p464 = scmp.le.s32.totalorder 1, %s20
    %p465 = scmp.lt.s32.totalorder %s20, 3
    %p466 = pnand %p464, %p465
    %p467 = pneg %p466
    // Predicated region
    $region73: #{transformer_encoder.5} parent=5 // pred_check
      _
    $region74: #{transformer_encoder.5} parent=5 // pred_check_branch
      %469 = sbr.rel (%p466) target = $region76
    $region75: #{transformer_encoder.5} parent=5 // pred_region
      %s470 = ssub.s32 %s20, 1
      %p471 = scmp.lt.s32.totalorder %s29, 1
      %s472 = scalar_select %p471, %s29, 1
      %p473 = scmp.lt.s32.totalorder %s30, 0
      %s474 = scalar_select %p473, %s30, 0
      %s475 = sadd.s32 %s474, %s472
      %s476 = smul.addr %s475, 8
      %s477 = scalar_lea.vmem %s0, %s476
      %p478 = pneg %p60
      %p479 = pneg %p57
      %p480 = scmp.lt.s32.totalorder %s29, 1
      %s481 = scalar_select %p480, %s29, 1
      %p482 = scmp.lt.s32.totalorder %s30, 0
      %s483 = scalar_select %p482, %s30, 0
      %s484 = smul.addr %s481, 4
      %s485 = sadd.s32 %s483, %s484
      %s486 = smul.addr %s485, 4
      %s487 = scalar_lea.vmem %s1, %s486
      %p488 = pneg %p88
      %p489 = pneg %p85
      %p490 = scmp.lt.s32.totalorder %s29, 1
      %s491 = scalar_select %p490, %s29, 1
      %s492 = smul.addr %s491, 4
      %s493 = smul.addr %s492, 4
      %s494 = scalar_lea.vmem %s2, %s493
      %p495 = pneg %p114
      %p496 = pneg %p111
      %p497 = scmp.lt.s32.totalorder %s29, 1
      %s498 = scalar_select %p497, %s29, 1
      %s499 = smul.addr %s498, 4
      %s500 = smul.addr %s499, 4
      %s501 = scalar_lea.vmem %s3, %s500
      %p502 = pneg %p140
      %p503 = pneg %p137
      %p504 = pneg %p161
      %p505 = pneg %p158
      %p506 = pneg %p182
      %p507 = pneg %p179
      %p508 = pneg %p203
      %p509 = pneg %p200
      %p510 = pneg %p224
      %p511 = pneg %p221
      %p512 = pneg %p245
      %p513 = pneg %p242
      %p514 = pneg %p266
      %p515 = pneg %p263
      %p516 = pneg %p287
      %p517 = pneg %p284
      %p518 = pneg %p308
      %p519 = pneg %p305
      %p520 = pneg %p329
      %p521 = pneg %p326
      %p522 = pneg %p350
      %p523 = pneg %p347
      %p524 = pneg %p378
      %p525 = pneg %p375
      %p526 = scmp.lt.s32.totalorder %s29, 1
      %s527 = scalar_select %p526, %s29, 1
      %p528 = scmp.lt.s32.totalorder %s30, 0
      %s529 = scalar_select %p528, %s30, 0
      %s530 = sadd.s32 %s529, %s527
      %s531 = smul.addr %s530, 8
      %s532 = scalar_lea.vmem %s14, %s531
      %p533 = scmp.lt.s32.totalorder %s29, 1
      %s534 = scalar_select %p533, %s29, 1
      %p535 = scmp.lt.s32.totalorder %s30, 0
      %s536 = scalar_select %p535, %s30, 0
      %s537 = sadd.s32 %s536, %s534
      %s538 = smul.addr %s537, 8
      %s539 = scalar_lea.vmem %s0, %s538
      %p540 = scmp.lt.s32.totalorder %s29, 1
      %s541 = scalar_select %p540, %s29, 1
      %p542 = scmp.lt.s32.totalorder %s30, 0
      %s543 = scalar_select %p542, %s30, 0
      %s544 = smul.addr %s541, 4
      %s545 = sadd.s32 %s543, %s544
      %s546 = smul.addr %s545, 4
      %s547 = scalar_lea.vmem %s1, %s546
      %p548 = scmp.lt.s32.totalorder %s29, 1
      %s549 = scalar_select %p548, %s29, 1
      %s550 = smul.addr %s549, 4
      %s551 = smul.addr %s550, 4
      %s552 = scalar_lea.vmem %s2, %s551
      %p553 = scmp.lt.s32.totalorder %s29, 1
      %s554 = scalar_select %p553, %s29, 1
      %s555 = smul.addr %s554, 4
      %s556 = smul.addr %s555, 4
      %s557 = scalar_lea.vmem %s3, %s556
      %p558 = scmp.lt.s32.totalorder %s29, 1
      %s559 = scalar_select %p558, %s29, 1
      %p560 = scmp.lt.s32.totalorder %s30, 0
      %s561 = scalar_select %p560, %s30, 0
      %s562 = sadd.s32 %s561, %s559
      %s563 = smul.addr %s562, 8
      %s564 = scalar_lea.vmem %s14, %s563
      %v566 = vld [vmem:[%s539] sm:$0xff]
      %v567 = vld [vmem:[%s547] sm:$0xf]
      %v568 = vld [vmem:[%s547 + $0x4] sm:$0xf]
      %v569 = vld [vmem:[%s547 + $0x8] sm:$0xf]
      %v570 = vld [vmem:[%s547 + $0xc] sm:$0xf]
      %v571 = vld [vmem:[%s552] sm:$0xf]
      %v572 = vld [vmem:[%s552 + $0x4] sm:$0xf]
      %v573 = vld [vmem:[%s552 + $0x8] sm:$0xf]
      %v574 = vld [vmem:[%s552 + $0xc] sm:$0xf]
      %v575 = vld [vmem:[%s557] sm:$0xf]
      %v576 = vld [vmem:[%s557 + $0x4] sm:$0xf]
      %v577 = vld [vmem:[%s557 + $0x8] sm:$0xf]
      %v578 = vld [vmem:[%s557 + $0xc] sm:$0xf]
      %vm579 = vcmask 64512
      %v581 = vsel %vm579, %v567, 0
      %v584 = vsel %vm579, %v571, 0
      %586 = vmatprep.subr.bf16.mxu0 0
      %587 = vmatpush1.bf16.xpose.msra.mxu0 0
      %588 = vmatprep.subr.bf16.mxu0 0
      %589 = vmatpush1.bf16.xpose.msra.mxu0 0
      %590 = vmatprep.subr.bf16.mxu0 0
      %591 = vmatpush1.bf16.xpose.msra.mxu0 0
      %592 = vmatprep.subr.bf16.mxu0 0
      %593 = vmatpush1.bf16.xpose.msra.mxu0 0
      %594 = vmatprep.subr.bf16.mxu0 0
      %595 = vmatpush1.bf16.xpose.msra.mxu0 0
      %596 = vmatprep.subr.bf16.mxu0 0
      %597 = vmatpush1.bf16.xpose.msra.mxu0 0
      %598 = vmatprep.subr.bf16.mxu0 0
      %599 = vmatpush1.bf16.xpose.msra.mxu0 0
      %600 = vmatprep.subr.bf16.mxu0 0
      %601 = vmatpush1.bf16.xpose.msra.mxu0 %v584
      %602 = vmatprep.subr.bf16.mxu0 0
      %603 = vmatpush2.bf16.xpose.msra.mxu0 0
      %604 = vmatprep.subr.bf16.mxu0 0
      %605 = vmatpush2.bf16.xpose.msra.mxu0 0
      %606 = vmatprep.subr.bf16.mxu0 0
      %607 = vmatpush2.bf16.xpose.msra.mxu0 0
      %608 = vmatprep.subr.bf16.mxu0 0
      %609 = vmatpush2.bf16.xpose.msra.mxu0 0
      %610 = vmatprep.subr.bf16.mxu0 0
      %611 = vmatpush2.bf16.xpose.msra.mxu0 0
      %612 = vmatprep.subr.bf16.mxu0 0
      %613 = vmatpush2.bf16.xpose.msra.mxu0 0
      %614 = vmatprep.subr.bf16.mxu0 0
      %615 = vmatpush2.bf16.xpose.msra.mxu0 0
      %616 = vmatprep.subr.bf16.mxu0 0
      %617 = vmatpush2.bf16.xpose.msra.mxu0 0
      %618 = vmatprep.mubr.bf16.mxu0 0
      %619 = vmatmul.mubr.bf16.gmra.mxu0 %v581
      %v620 = vpop.f32.mrf.mxu0
      %v621 = vadd.f32 0.0, %v620
      %v622 = vpop.f32.mrf.mxu0
      %v623 = vpop.f32.mrf.mxu0
      %v624 = vpop.f32.mrf.mxu0
      %625 = vdwg.mxu0
      %v627 = vsel %vm579, %v568, 0
      %v630 = vsel %vm579, %v572, 0
      %632 = vmatprep.subr.bf16.mxu0 0
      %633 = vmatpush1.bf16.xpose.msra.mxu0 0
      %634 = vmatprep.subr.bf16.mxu0 0
      %635 = vmatpush1.bf16.xpose.msra.mxu0 0
      %636 = vmatprep.subr.bf16.mxu0 0
      %637 = vmatpush1.bf16.xpose.msra.mxu0 0
      %638 = vmatprep.subr.bf16.mxu0 0
      %639 = vmatpush1.bf16.xpose.msra.mxu0 0
      %640 = vmatprep.subr.bf16.mxu0 0
      %641 = vmatpush1.bf16.xpose.msra.mxu0 0
      %642 = vmatprep.subr.bf16.mxu0 0
      %643 = vmatpush1.bf16.xpose.msra.mxu0 0
      %644 = vmatprep.subr.bf16.mxu0 0
      %645 = vmatpush1.bf16.xpose.msra.mxu0 0
      %646 = vmatprep.subr.bf16.mxu0 0
      %647 = vmatpush1.bf16.xpose.msra.mxu0 %v630
      %648 = vmatprep.subr.bf16.mxu0 0
      %649 = vmatpush2.bf16.xpose.msra.mxu0 0
      %650 = vmatprep.subr.bf16.mxu0 0
      %651 = vmatpush2.bf16.xpose.msra.mxu0 0
      %652 = vmatprep.subr.bf16.mxu0 0
      %653 = vmatpush2.bf16.xpose.msra.mxu0 0
      %654 = vmatprep.subr.bf16.mxu0 0
      %655 = vmatpush2.bf16.xpose.msra.mxu0 0
      %656 = vmatprep.subr.bf16.mxu0 0
      %657 = vmatpush2.bf16.xpose.msra.mxu0 0
      %658 = vmatprep.subr.bf16.mxu0 0
      %659 = vmatpush2.bf16.xpose.msra.mxu0 0
      %660 = vmatprep.subr.bf16.mxu0 0
      %661 = vmatpush2.bf16.xpose.msra.mxu0 0
      %662 = vmatprep.subr.bf16.mxu0 0
      %663 = vmatpush2.bf16.xpose.msra.mxu0 0
      %664 = vmatprep.mubr.bf16.mxu0 0
      %665 = vmatmul.mubr.bf16.gmra.mxu0 %v627
      %v666 = vpop.f32.mrf.mxu0
      %v667 = vadd.f32 0.0, %v666
      %v668 = vpop.f32.mrf.mxu0
      %v669 = vpop.f32.mrf.mxu0
      %v670 = vpop.f32.mrf.mxu0
      %671 = vdwg.mxu0
      %v673 = vsel %vm579, %v569, 0
      %v676 = vsel %vm579, %v573, 0
      %678 = vmatprep.subr.bf16.mxu0 0
      %679 = vmatpush1.bf16.xpose.msra.mxu0 0
      %680 = vmatprep.subr.bf16.mxu0 0
      %681 = vmatpush1.bf16.xpose.msra.mxu0 0
      %682 = vmatprep.subr.bf16.mxu0 0
      %683 = vmatpush1.bf16.xpose.msra.mxu0 0
      %684 = vmatprep.subr.bf16.mxu0 0
      %685 = vmatpush1.bf16.xpose.msra.mxu0 0
      %686 = vmatprep.subr.bf16.mxu0 0
      %687 = vmatpush1.bf16.xpose.msra.mxu0 0
      %688 = vmatprep.subr.bf16.mxu0 0
      %689 = vmatpush1.bf16.xpose.msra.mxu0 0
      %690 = vmatprep.subr.bf16.mxu0 0
      %691 = vmatpush1.bf16.xpose.msra.mxu0 0
      %692 = vmatprep.subr.bf16.mxu0 0
      %693 = vmatpush1.bf16.xpose.msra.mxu0 %v676
      %694 = vmatprep.subr.bf16.mxu0 0
      %695 = vmatpush2.bf16.xpose.msra.mxu0 0
      %696 = vmatprep.subr.bf16.mxu0 0
      %697 = vmatpush2.bf16.xpose.msra.mxu0 0
      %698 = vmatprep.subr.bf16.mxu0 0
      %699 = vmatpush2.bf16.xpose.msra.mxu0 0
      %700 = vmatprep.subr.bf16.mxu0 0
      %701 = vmatpush2.bf16.xpose.msra.mxu0 0
      %702 = vmatprep.subr.bf16.mxu0 0
      %703 = vmatpush2.bf16.xpose.msra.mxu0 0
      %704 = vmatprep.subr.bf16.mxu0 0
      %705 = vmatpush2.bf16.xpose.msra.mxu0 0
      %706 = vmatprep.subr.bf16.mxu0 0
      %707 = vmatpush2.bf16.xpose.msra.mxu0 0
      %708 = vmatprep.subr.bf16.mxu0 0
      %709 = vmatpush2.bf16.xpose.msra.mxu0 0
      %710 = vmatprep.mubr.bf16.mxu0 0
      %711 = vmatmul.mubr.bf16.gmra.mxu0 %v673
      %v712 = vpop.f32.mrf.mxu0
      %v713 = vadd.f32 0.0, %v712
      %v714 = vpop.f32.mrf.mxu0
      %v715 = vpop.f32.mrf.mxu0
      %v716 = vpop.f32.mrf.mxu0
      %717 = vdwg.mxu0
      %v719 = vsel %vm579, %v570, 0
      %v722 = vsel %vm579, %v574, 0
      %724 = vmatprep.subr.bf16.mxu0 0
      %725 = vmatpush1.bf16.xpose.msra.mxu0 0
      %726 = vmatprep.subr.bf16.mxu0 0
      %727 = vmatpush1.bf16.xpose.msra.mxu0 0
      %728 = vmatprep.subr.bf16.mxu0 0
      %729 = vmatpush1.bf16.xpose.msra.mxu0 0
      %730 = vmatprep.subr.bf16.mxu0 0
      %731 = vmatpush1.bf16.xpose.msra.mxu0 0
      %732 = vmatprep.subr.bf16.mxu0 0
      %733 = vmatpush1.bf16.xpose.msra.mxu0 0
      %734 = vmatprep.subr.bf16.mxu0 0
      %735 = vmatpush1.bf16.xpose.msra.mxu0 0
      %736 = vmatprep.subr.bf16.mxu0 0
      %737 = vmatpush1.bf16.xpose.msra.mxu0 0
      %738 = vmatprep.subr.bf16.mxu0 0
      %739 = vmatpush1.bf16.xpose.msra.mxu0 %v722
      %740 = vmatprep.subr.bf16.mxu0 0
      %741 = vmatpush2.bf16.xpose.msra.mxu0 0
      %742 = vmatprep.subr.bf16.mxu0 0
      %743 = vmatpush2.bf16.xpose.msra.mxu0 0
      %744 = vmatprep.subr.bf16.mxu0 0
      %745 = vmatpush2.bf16.xpose.msra.mxu0 0
      %746 = vmatprep.subr.bf16.mxu0 0
      %747 = vmatpush2.bf16.xpose.msra.mxu0 0
      %748 = vmatprep.subr.bf16.mxu0 0
      %749 = vmatpush2.bf16.xpose.msra.mxu0 0
      %750 = vmatprep.subr.bf16.mxu0 0
      %751 = vmatpush2.bf16.xpose.msra.mxu0 0
      %752 = vmatprep.subr.bf16.mxu0 0
      %753 = vmatpush2.bf16.xpose.msra.mxu0 0
      %754 = vmatprep.subr.bf16.mxu0 0
      %755 = vmatpush2.bf16.xpose.msra.mxu0 0
      %756 = vmatprep.mubr.bf16.mxu0 0
      %757 = vmatmul.mubr.bf16.gmra.mxu0 %v719
      %v758 = vpop.f32.mrf.mxu0
      %v759 = vadd.f32 0.0, %v758
      %v760 = vpop.f32.mrf.mxu0
      %v761 = vpop.f32.mrf.mxu0
      %v762 = vpop.f32.mrf.mxu0
      %763 = vdwg.mxu0
      %v764 = vsel %vm579, %v621, -inf
      %765 = vmax.xlane.f32.xlu0 %v764
      %v766 = vpop.xlane.xlu0 %765
      %v767 = vsel %vm579, %v667, -inf
      %768 = vmax.xlane.f32.xlu0 %v767
      %v769 = vpop.xlane.xlu0 %768
      %v770 = vsel %vm579, %v713, -inf
      %771 = vmax.xlane.f32.xlu0 %v770
      %v772 = vpop.xlane.xlu0 %771
      %v773 = vsel %vm579, %v759, -inf
      %774 = vmax.xlane.f32.xlu0 %v773
      %v775 = vpop.xlane.xlu0 %774
      %v776 = vsub.f32 %v621, %v766
      %v777 = vsub.f32 %v667, %v769
      %v778 = vsub.f32 %v713, %v772
      %v779 = vsub.f32 %v759, %v775
      %v780 = vmul.f32 %v776, 1.442695
      %v781 = vpow.pop %v780
      %v782 = vmul.f32 %v777, 1.442695
      %v783 = vpow.pop %v782
      %v784 = vmul.f32 %v778, 1.442695
      %v785 = vpow.pop %v784
      %v786 = vmul.f32 %v779, 1.442695
      %v787 = vpow.pop %v786
      %v788 = vsel %vm579, %v781, 0.0
      %789 = vadd.xlane.f32.xlu0 %v788
      %v790 = vpop.xlane.xlu0 %789
      %v791 = vsel %vm579, %v783, 0.0
      %792 = vadd.xlane.f32.xlu0 %v791
      %v793 = vpop.xlane.xlu0 %792
      %v794 = vsel %vm579, %v785, 0.0
      %795 = vadd.xlane.f32.xlu0 %v794
      %v796 = vpop.xlane.xlu0 %795
      %v797 = vsel %vm579, %v787, 0.0
      %798 = vadd.xlane.f32.xlu0 %v797
      %v799 = vpop.xlane.xlu0 %798
      %v800 = vpack.c.bf16 %v781, %v781
      %v801 = vpack.c.bf16 %v783, %v783
      %v802 = vpack.c.bf16 %v785, %v785
      %v803 = vpack.c.bf16 %v787, %v787
      %v805 = vsel %vm579, %v800, 0
      %vm807 = vcmask 1043456
      %v809 = vsel %vm807, %v575, 0
      %811 = vmatprep.subr.bf16.mxu0 0
      %812 = vmatpush1.bf16.msra.mxu0 0
      %813 = vmatprep.subr.bf16.mxu0 0
      %814 = vmatpush1.bf16.msra.mxu0 0
      %815 = vmatprep.subr.bf16.mxu0 0
      %816 = vmatpush1.bf16.msra.mxu0 0
      %817 = vmatprep.subr.bf16.mxu0 0
      %818 = vmatpush1.bf16.msra.mxu0 0
      %819 = vmatprep.subr.bf16.mxu0 0
      %820 = vmatpush1.bf16.msra.mxu0 0
      %821 = vmatprep.subr.bf16.mxu0 0
      %822 = vmatpush1.bf16.msra.mxu0 0
      %823 = vmatprep.subr.bf16.mxu0 0
      %824 = vmatpush1.bf16.msra.mxu0 0
      %825 = vmatprep.subr.bf16.mxu0 0
      %826 = vmatpush1.bf16.msra.mxu0 %v809
      %827 = vmatprep.subr.bf16.mxu0 0
      %828 = vmatpush2.bf16.msra.mxu0 0
      %829 = vmatprep.subr.bf16.mxu0 0
      %830 = vmatpush2.bf16.msra.mxu0 0
      %831 = vmatprep.subr.bf16.mxu0 0
      %832 = vmatpush2.bf16.msra.mxu0 0
      %833 = vmatprep.subr.bf16.mxu0 0
      %834 = vmatpush2.bf16.msra.mxu0 0
      %835 = vmatprep.subr.bf16.mxu0 0
      %836 = vmatpush2.bf16.msra.mxu0 0
      %837 = vmatprep.subr.bf16.mxu0 0
      %838 = vmatpush2.bf16.msra.mxu0 0
      %839 = vmatprep.subr.bf16.mxu0 0
      %840 = vmatpush2.bf16.msra.mxu0 0
      %841 = vmatprep.subr.bf16.mxu0 0
      %842 = vmatpush2.bf16.msra.mxu0 0
      %843 = vmatprep.mubr.bf16.mxu0 0
      %844 = vmatmul.mubr.bf16.gmra.mxu0 %v805
      %v845 = vpop.f32.mrf.mxu0
      %v846 = vadd.f32 0.0, %v845
      %v847 = vpop.f32.mrf.mxu0
      %v848 = vpop.f32.mrf.mxu0
      %v849 = vpop.f32.mrf.mxu0
      %850 = vdwg.mxu0
      %v852 = vsel %vm579, %v801, 0
      %v855 = vsel %vm807, %v576, 0
      %857 = vmatprep.subr.bf16.mxu0 0
      %858 = vmatpush1.bf16.msra.mxu0 0
      %859 = vmatprep.subr.bf16.mxu0 0
      %860 = vmatpush1.bf16.msra.mxu0 0
      %861 = vmatprep.subr.bf16.mxu0 0
      %862 = vmatpush1.bf16.msra.mxu0 0
      %863 = vmatprep.subr.bf16.mxu0 0
      %864 = vmatpush1.bf16.msra.mxu0 0
      %865 = vmatprep.subr.bf16.mxu0 0
      %866 = vmatpush1.bf16.msra.mxu0 0
      %867 = vmatprep.subr.bf16.mxu0 0
      %868 = vmatpush1.bf16.msra.mxu0 0
      %869 = vmatprep.subr.bf16.mxu0 0
      %870 = vmatpush1.bf16.msra.mxu0 0
      %871 = vmatprep.subr.bf16.mxu0 0
      %872 = vmatpush1.bf16.msra.mxu0 %v855
      %873 = vmatprep.subr.bf16.mxu0 0
      %874 = vmatpush2.bf16.msra.mxu0 0
      %875 = vmatprep.subr.bf16.mxu0 0
      %876 = vmatpush2.bf16.msra.mxu0 0
      %877 = vmatprep.subr.bf16.mxu0 0
      %878 = vmatpush2.bf16.msra.mxu0 0
      %879 = vmatprep.subr.bf16.mxu0 0
      %880 = vmatpush2.bf16.msra.mxu0 0
      %881 = vmatprep.subr.bf16.mxu0 0
      %882 = vmatpush2.bf16.msra.mxu0 0
      %883 = vmatprep.subr.bf16.mxu0 0
      %884 = vmatpush2.bf16.msra.mxu0 0
      %885 = vmatprep.subr.bf16.mxu0 0
      %886 = vmatpush2.bf16.msra.mxu0 0
      %887 = vmatprep.subr.bf16.mxu0 0
      %888 = vmatpush2.bf16.msra.mxu0 0
      %889 = vmatprep.mubr.bf16.mxu0 0
      %890 = vmatmul.mubr.bf16.gmra.mxu0 %v852
      %v891 = vpop.f32.mrf.mxu0
      %v892 = vadd.f32 0.0, %v891
      %v893 = vpop.f32.mrf.mxu0
      %v894 = vpop.f32.mrf.mxu0
      %v895 = vpop.f32.mrf.mxu0
      %896 = vdwg.mxu0
      %v898 = vsel %vm579, %v802, 0
      %v901 = vsel %vm807, %v577, 0
      %903 = vmatprep.subr.bf16.mxu0 0
      %904 = vmatpush1.bf16.msra.mxu0 0
      %905 = vmatprep.subr.bf16.mxu0 0
      %906 = vmatpush1.bf16.msra.mxu0 0
      %907 = vmatprep.subr.bf16.mxu0 0
      %908 = vmatpush1.bf16.msra.mxu0 0
      %909 = vmatprep.subr.bf16.mxu0 0
      %910 = vmatpush1.bf16.msra.mxu0 0
      %911 = vmatprep.subr.bf16.mxu0 0
      %912 = vmatpush1.bf16.msra.mxu0 0
      %913 = vmatprep.subr.bf16.mxu0 0
      %914 = vmatpush1.bf16.msra.mxu0 0
      %915 = vmatprep.subr.bf16.mxu0 0
      %916 = vmatpush1.bf16.msra.mxu0 0
      %917 = vmatprep.subr.bf16.mxu0 0
      %918 = vmatpush1.bf16.msra.mxu0 %v901
      %919 = vmatprep.subr.bf16.mxu0 0
      %920 = vmatpush2.bf16.msra.mxu0 0
      %921 = vmatprep.subr.bf16.mxu0 0
      %922 = vmatpush2.bf16.msra.mxu0 0
      %923 = vmatprep.subr.bf16.mxu0 0
      %924 = vmatpush2.bf16.msra.mxu0 0
      %925 = vmatprep.subr.bf16.mxu0 0
      %926 = vmatpush2.bf16.msra.mxu0 0
      %927 = vmatprep.subr.bf16.mxu0 0
      %928 = vmatpush2.bf16.msra.mxu0 0
      %929 = vmatprep.subr.bf16.mxu0 0
      %930 = vmatpush2.bf16.msra.mxu0 0
      %931 = vmatprep.subr.bf16.mxu0 0
      %932 = vmatpush2.bf16.msra.mxu0 0
      %933 = vmatprep.subr.bf16.mxu0 0
      %934 = vmatpush2.bf16.msra.mxu0 0
      %935 = vmatprep.mubr.bf16.mxu0 0
      %936 = vmatmul.mubr.bf16.gmra.mxu0 %v898
      %v937 = vpop.f32.mrf.mxu0
      %v938 = vadd.f32 0.0, %v937
      %v939 = vpop.f32.mrf.mxu0
      %v940 = vpop.f32.mrf.mxu0
      %v941 = vpop.f32.mrf.mxu0
      %942 = vdwg.mxu0
      %v944 = vsel %vm579, %v803, 0
      %v947 = vsel %vm807, %v578, 0
      %949 = vmatprep.subr.bf16.mxu0 0
      %950 = vmatpush1.bf16.msra.mxu0 0
      %951 = vmatprep.subr.bf16.mxu0 0
      %952 = vmatpush1.bf16.msra.mxu0 0
      %953 = vmatprep.subr.bf16.mxu0 0
      %954 = vmatpush1.bf16.msra.mxu0 0
      %955 = vmatprep.subr.bf16.mxu0 0
      %956 = vmatpush1.bf16.msra.mxu0 0
      %957 = vmatprep.subr.bf16.mxu0 0
      %958 = vmatpush1.bf16.msra.mxu0 0
      %959 = vmatprep.subr.bf16.mxu0 0
      %960 = vmatpush1.bf16.msra.mxu0 0
      %961 = vmatprep.subr.bf16.mxu0 0
      %962 = vmatpush1.bf16.msra.mxu0 0
      %963 = vmatprep.subr.bf16.mxu0 0
      %964 = vmatpush1.bf16.msra.mxu0 %v947
      %965 = vmatprep.subr.bf16.mxu0 0
      %966 = vmatpush2.bf16.msra.mxu0 0
      %967 = vmatprep.subr.bf16.mxu0 0
      %968 = vmatpush2.bf16.msra.mxu0 0
      %969 = vmatprep.subr.bf16.mxu0 0
      %970 = vmatpush2.bf16.msra.mxu0 0
      %971 = vmatprep.subr.bf16.mxu0 0
      %972 = vmatpush2.bf16.msra.mxu0 0
      %973 = vmatprep.subr.bf16.mxu0 0
      %974 = vmatpush2.bf16.msra.mxu0 0
      %975 = vmatprep.subr.bf16.mxu0 0
      %976 = vmatpush2.bf16.msra.mxu0 0
      %977 = vmatprep.subr.bf16.mxu0 0
      %978 = vmatpush2.bf16.msra.mxu0 0
      %979 = vmatprep.subr.bf16.mxu0 0
      %980 = vmatpush2.bf16.msra.mxu0 0
      %981 = vmatprep.mubr.bf16.mxu0 0
      %982 = vmatmul.mubr.bf16.gmra.mxu0 %v944
      %v983 = vpop.f32.mrf.mxu0
      %v984 = vadd.f32 0.0, %v983
      %v985 = vpop.f32.mrf.mxu0
      %v986 = vpop.f32.mrf.mxu0
      %v987 = vpop.f32.mrf.mxu0
      %988 = vdwg.mxu0
      %v989 = vrcp.pop %v790
      %v990 = vrcp.pop %v793
      %v991 = vrcp.pop %v796
      %v992 = vrcp.pop %v799
      %v993 = vmul.f32 %v846, %v989
      %v994 = vmul.f32 %v892, %v990
      %v995 = vmul.f32 %v938, %v991
      %v996 = vmul.f32 %v984, %v992
      %997 = vst.msk [vmem:[#allocation2] sm:$0xff] %vm579, %v993
      %999 = vrot.lane.b32.xlu0 %v994, 8
      %v1000 = vpop.permute.xlu0 %999
      %vm1002 = vcmask 130112
      %1003 = vst.msk [vmem:[#allocation2] sm:$0xff] %vm1002, %v1000
      %1005 = vrot.lane.b32.xlu0 %v995, 16
      %v1006 = vpop.permute.xlu0 %1005
      %vm1008 = vcmask 195712
      %1009 = vst.msk [vmem:[#allocation2] sm:$0xff] %vm1008, %v1006
      %1011 = vrot.lane.b32.xlu0 %v996, 24
      %v1012 = vpop.permute.xlu0 %1011
      %vm1014 = vcmask 261312
      %1015 = vst.msk [vmem:[#allocation2] sm:$0xff] %vm1014, %v1012
      %v1016 = vld [vmem:[#allocation2] sm:$0xff]
      %v1017 = vpack.c.bf16 %v1016, %v1016
      %v1018 = vld [vmem:[%s4] sm:$0xf]
      %v1019 = vld [vmem:[%s4 + $0x4] sm:$0xf]
      %v1020 = vld [vmem:[%s4 + $0x8] sm:$0xf]
      %v1021 = vld [vmem:[%s4 + $0xc] sm:$0xf]
      %v1022 = vld [vmem:[%s5] sm:$0x1]
      %v1024 = vlaneseq
      %v1025 = vshrl.u32 %v1024, 7
      %v1026 = vsub.s32 0, %v1025
      %v1027 = vrot.slane %v1022, %v1026
      %v1033 = vunpack.c.l.b16 %v1018
      %v1034 = vunpack.c.l.b16 %v1019
      %v1035 = vunpack.c.l.b16 %v1020
      %v1036 = vunpack.c.l.b16 %v1021
      %v1037 = vpack.c.b16 %v1034, %v1033
      %v1038 = vpack.c.b16 %v1036, %v1035
      %vm1041 = vcmask 261120
      %v1043 = vsel %vm1041, %v1017, 0
      %1045 = vmatprep.subr.bf16.mxu0 0
      %1046 = vmatpush1.bf16.msra.mxu0 0
      %1047 = vmatprep.subr.bf16.mxu0 0
      %1048 = vmatpush1.bf16.msra.mxu0 0
      %1049 = vmatprep.subr.bf16.mxu0 0
      %1050 = vmatpush1.bf16.msra.mxu0 0
      %1051 = vmatprep.subr.bf16.mxu0 0
      %1052 = vmatpush1.bf16.msra.mxu0 0
      %1053 = vmatprep.subr.bf16.mxu0 0
      %1054 = vmatpush1.bf16.msra.mxu0 0
      %1055 = vmatprep.subr.bf16.mxu0 0
      %1056 = vmatpush1.bf16.msra.mxu0 0
      %1057 = vmatprep.subr.bf16.mxu0 0
      %1058 = vmatpush1.bf16.msra.mxu0 %v1038
      %1059 = vmatprep.subr.bf16.mxu0 0
      %1060 = vmatpush1.bf16.msra.mxu0 %v1037
      %1061 = vmatprep.subr.bf16.mxu0 0
      %1062 = vmatpush2.bf16.msra.mxu0 0
      %1063 = vmatprep.subr.bf16.mxu0 0
      %1064 = vmatpush2.bf16.msra.mxu0 0
      %1065 = vmatprep.subr.bf16.mxu0 0
      %1066 = vmatpush2.bf16.msra.mxu0 0
      %1067 = vmatprep.subr.bf16.mxu0 0
      %1068 = vmatpush2.bf16.msra.mxu0 0
      %1069 = vmatprep.subr.bf16.mxu0 0
      %1070 = vmatpush2.bf16.msra.mxu0 0
      %1071 = vmatprep.subr.bf16.mxu0 0
      %1072 = vmatpush2.bf16.msra.mxu0 0
      %1073 = vmatprep.subr.bf16.mxu0 0
      %1074 = vmatpush2.bf16.msra.mxu0 0
      %1075 = vmatprep.subr.bf16.mxu0 0
      %1076 = vmatpush2.bf16.msra.mxu0 0
      %1077 = vmatprep.mubr.bf16.mxu0 0
      %1078 = vmatmul.mubr.bf16.gmra.mxu0 %v1043
      %v1079 = vpop.f32.mrf.mxu0
      %v1080 = vadd.f32 %v1027, %v1079
      %v1081 = vpop.f32.mrf.mxu0
      %v1082 = vpop.f32.mrf.mxu0
      %v1083 = vpop.f32.mrf.mxu0
      %1084 = vdwg.mxu0
      %v1085 = vadd.f32 %v566, %v1080
      %v1086 = vsel %vm1041, %v1085, 0.0
      %1087 = vadd.xlane.f32.xlu0 %v1086
      %v1088 = vpop.xlane.xlu0 %1087
      %v1089 = vrcp.pop 32.0
      %v1090 = vmul.f32 %v1088, %v1089
      %v1091 = vsub.f32 %v1085, %v1090
      %v1092 = vmul.f32 %v1091, %v1091
      %v1093 = vsel %vm1041, %v1092, 0.0
      %1094 = vadd.xlane.f32.xlu0 %v1093
      %v1095 = vpop.xlane.xlu0 %1094
      %v1096 = vmul.f32 %v1095, %v1089
      %v1097 = vadd.f32 %v1096, 1e-05
      %v1098 = vrsqrt.pop %v1097
      %v1099 = vmul.f32 %v1091, %v1098
      %v1100 = vld [vmem:[%s6] sm:$0x1]
      %v1102 = vlaneseq
      %v1103 = vshrl.u32 %v1102, 7
      %v1104 = vsub.s32 0, %v1103
      %v1105 = vrot.slane %v1100, %v1104
      %v1107 = vmul.f32 %v1099, %v1105
      %v1108 = vld [vmem:[%s7] sm:$0x1]
      %v1110 = vlaneseq
      %v1111 = vshrl.u32 %v1110, 7
      %v1112 = vsub.s32 0, %v1111
      %v1113 = vrot.slane %v1108, %v1112
      %v1115 = vadd.f32 %v1107, %v1113
      %v1116 = vpack.c.bf16 %v1115, %v1115
      %v1117 = vld [vmem:[%s8] sm:$0xf]
      %v1118 = vld [vmem:[%s8 + $0x4] sm:$0xf]
      %v1119 = vld [vmem:[%s8 + $0x8] sm:$0xf]
      %v1120 = vld [vmem:[%s8 + $0xc] sm:$0xf]
      %v1121 = vld [vmem:[%s9] sm:$0x1]
      %v1123 = vlaneseq
      %v1124 = vshrl.u32 %v1123, 7
      %v1125 = vsub.s32 0, %v1124
      %v1126 = vrot.slane %v1121, %v1125
      %v1132 = vunpack.c.l.b16 %v1117
      %v1133 = vunpack.c.l.b16 %v1118
      %v1134 = vunpack.c.l.b16 %v1119
      %v1135 = vunpack.c.l.b16 %v1120
      %v1136 = vpack.c.b16 %v1133, %v1132
      %v1137 = vpack.c.b16 %v1135, %v1134
      %v1141 = vsel %vm1041, %v1116, 0
      %1143 = vmatprep.subr.bf16.mxu0 0
      %1144 = vmatpush1.bf16.msra.mxu0 0
      %1145 = vmatprep.subr.bf16.mxu0 0
      %1146 = vmatpush1.bf16.msra.mxu0 0
      %1147 = vmatprep.subr.bf16.mxu0 0
      %1148 = vmatpush1.bf16.msra.mxu0 0
      %1149 = vmatprep.subr.bf16.mxu0 0
      %1150 = vmatpush1.bf16.msra.mxu0 0
      %1151 = vmatprep.subr.bf16.mxu0 0
      %1152 = vmatpush1.bf16.msra.mxu0 0
      %1153 = vmatprep.subr.bf16.mxu0 0
      %1154 = vmatpush1.bf16.msra.mxu0 0
      %1155 = vmatprep.subr.bf16.mxu0 0
      %1156 = vmatpush1.bf16.msra.mxu0 %v1137
      %1157 = vmatprep.subr.bf16.mxu0 0
      %1158 = vmatpush1.bf16.msra.mxu0 %v1136
      %1159 = vmatprep.subr.bf16.mxu0 0
      %1160 = vmatpush2.bf16.msra.mxu0 0
      %1161 = vmatprep.subr.bf16.mxu0 0
      %1162 = vmatpush2.bf16.msra.mxu0 0
      %1163 = vmatprep.subr.bf16.mxu0 0
      %1164 = vmatpush2.bf16.msra.mxu0 0
      %1165 = vmatprep.subr.bf16.mxu0 0
      %1166 = vmatpush2.bf16.msra.mxu0 0
      %1167 = vmatprep.subr.bf16.mxu0 0
      %1168 = vmatpush2.bf16.msra.mxu0 0
      %1169 = vmatprep.subr.bf16.mxu0 0
      %1170 = vmatpush2.bf16.msra.mxu0 0
      %1171 = vmatprep.subr.bf16.mxu0 0
      %1172 = vmatpush2.bf16.msra.mxu0 0
      %1173 = vmatprep.subr.bf16.mxu0 0
      %1174 = vmatpush2.bf16.msra.mxu0 0
      %1175 = vmatprep.mubr.bf16.mxu0 0
      %1176 = vmatmul.mubr.bf16.gmra.mxu0 %v1141
      %v1177 = vpop.f32.mrf.mxu0
      %v1178 = vadd.f32 %v1126, %v1177
      %v1179 = vpop.f32.mrf.mxu0
      %v1180 = vpop.f32.mrf.mxu0
      %v1181 = vpop.f32.mrf.mxu0
      %1182 = vdwg.mxu0
      %v1183 = vmax.f32 %v1178, 0.0
      %v1184 = vpack.c.bf16 %v1183, %v1183
      %v1185 = vld [vmem:[%s10] sm:$0xf]
      %v1186 = vld [vmem:[%s10 + $0x4] sm:$0xf]
      %v1187 = vld [vmem:[%s10 + $0x8] sm:$0xf]
      %v1188 = vld [vmem:[%s10 + $0xc] sm:$0xf]
      %v1189 = vld [vmem:[%s10 + $0x10] sm:$0xf]
      %v1190 = vld [vmem:[%s10 + $0x14] sm:$0xf]
      %v1191 = vld [vmem:[%s10 + $0x18] sm:$0xf]
      %v1192 = vld [vmem:[%s10 + $0x1c] sm:$0xf]
      %v1193 = vld [vmem:[%s11] sm:$0x1]
      %v1195 = vlaneseq
      %v1196 = vshrl.u32 %v1195, 7
      %v1197 = vsub.s32 0, %v1196
      %v1198 = vrot.slane %v1193, %v1197
      %v1208 = vunpack.c.l.b16 %v1185
      %v1209 = vunpack.c.l.b16 %v1186
      %v1210 = vunpack.c.l.b16 %v1187
      %v1211 = vunpack.c.l.b16 %v1188
      %v1212 = vunpack.c.l.b16 %v1189
      %v1213 = vunpack.c.l.b16 %v1190
      %v1214 = vunpack.c.l.b16 %v1191
      %v1215 = vunpack.c.l.b16 %v1192
      %v1216 = vpack.c.b16 %v1209, %v1208
      %v1217 = vpack.c.b16 %v1211, %v1210
      %v1218 = vpack.c.b16 %v1213, %v1212
      %v1219 = vpack.c.b16 %v1215, %v1214
      %vm1224 = vcmask 523264
      %v1226 = vsel %vm1224, %v1184, 0
      %1228 = vmatprep.subr.bf16.mxu0 0
      %1229 = vmatpush1.bf16.msra.mxu0 0
      %1230 = vmatprep.subr.bf16.mxu0 0
      %1231 = vmatpush1.bf16.msra.mxu0 0
      %1232 = vmatprep.subr.bf16.mxu0 0
      %1233 = vmatpush1.bf16.msra.mxu0 0
      %1234 = vmatprep.subr.bf16.mxu0 0
      %1235 = vmatpush1.bf16.msra.mxu0 0
      %1236 = vmatprep.subr.bf16.mxu0 0
      %1237 = vmatpush1.bf16.msra.mxu0 %v1219
      %1238 = vmatprep.subr.bf16.mxu0 0
      %1239 = vmatpush1.bf16.msra.mxu0 %v1218
      %1240 = vmatprep.subr.bf16.mxu0 0
      %1241 = vmatpush1.bf16.msra.mxu0 %v1217
      %1242 = vmatprep.subr.bf16.mxu0 0
      %1243 = vmatpush1.bf16.msra.mxu0 %v1216
      %1244 = vmatprep.subr.bf16.mxu0 0
      %1245 = vmatpush2.bf16.msra.mxu0 0
      %1246 = vmatprep.subr.bf16.mxu0 0
      %1247 = vmatpush2.bf16.msra.mxu0 0
      %1248 = vmatprep.subr.bf16.mxu0 0
      %1249 = vmatpush2.bf16.msra.mxu0 0
      %1250 = vmatprep.subr.bf16.mxu0 0
      %1251 = vmatpush2.bf16.msra.mxu0 0
      %1252 = vmatprep.subr.bf16.mxu0 0
      %1253 = vmatpush2.bf16.msra.mxu0 0
      %1254 = vmatprep.subr.bf16.mxu0 0
      %1255 = vmatpush2.bf16.msra.mxu0 0
      %1256 = vmatprep.subr.bf16.mxu0 0
      %1257 = vmatpush2.bf16.msra.mxu0 0
      %1258 = vmatprep.subr.bf16.mxu0 0
      %1259 = vmatpush2.bf16.msra.mxu0 0
      %1260 = vmatprep.mubr.bf16.mxu0 0
      %1261 = vmatmul.mubr.bf16.gmra.mxu0 %v1226
      %v1262 = vpop.f32.mrf.mxu0
      %v1263 = vadd.f32 %v1198, %v1262
      %v1264 = vpop.f32.mrf.mxu0
      %v1265 = vpop.f32.mrf.mxu0
      %v1266 = vpop.f32.mrf.mxu0
      %1267 = vdwg.mxu0
      %v1268 = vadd.f32 %v1115, %v1263
      %v1269 = vsel %vm1041, %v1268, 0.0
      %1270 = vadd.xlane.f32.xlu0 %v1269
      %v1271 = vpop.xlane.xlu0 %1270
      %v1272 = vmul.f32 %v1271, %v1089
      %v1273 = vsub.f32 %v1268, %v1272
      %v1274 = vmul.f32 %v1273, %v1273
      %v1275 = vsel %vm1041, %v1274, 0.0
      %1276 = vadd.xlane.f32.xlu0 %v1275
      %v1277 = vpop.xlane.xlu0 %1276
      %v1278 = vmul.f32 %v1277, %v1089
      %v1279 = vadd.f32 %v1278, 1e-05
      %v1280 = vrsqrt.pop %v1279
      %v1281 = vmul.f32 %v1273, %v1280
      %v1282 = vld [vmem:[%s12] sm:$0x1]
      %v1284 = vlaneseq
      %v1285 = vshrl.u32 %v1284, 7
      %v1286 = vsub.s32 0, %v1285
      %v1287 = vrot.slane %v1282, %v1286
      %v1289 = vmul.f32 %v1281, %v1287
      %v1290 = vld [vmem:[%s13] sm:$0x1]
      %v1292 = vlaneseq
      %v1293 = vshrl.u32 %v1292, 7
      %v1294 = vsub.s32 0, %v1293
      %v1295 = vrot.slane %v1290, %v1294
      %v1297 = vadd.f32 %v1289, %v1295
      %1298 = vst.msk [vmem:[%s564] sm:$0xff] %vm1041, %v1297
      %p1299 = scmp.lt.s32.totalorder %s29, 1
      %s1300 = scalar_select %p1299, %s29, 1
      %p1301 = scmp.lt.s32.totalorder %s30, 0
      %s1302 = scalar_select %p1301, %s30, 0
      %s1303 = sadd.s32 %s1302, %s1300
      %s1304 = smul.addr %s1303, 8
      %s1305 = scalar_lea.vmem %s14, %s1304
      // Predicated region
      $region77: #{transformer_encoder.5} parent=75 // pred_check
        %p1306 = pneg %p375
      $region78: #{transformer_encoder.5} parent=75 // pred_check_branch
        %1308 = sbr.rel (%p1306) target = $region80
      $region79: #{transformer_encoder.5} parent=75 // pred_region
        _
      $region80: #{transformer_encoder.5} parent=75 // pred_fallthru
        _
    $region76: #{transformer_encoder.5} parent=5 // pred_fallthru
      _
    %p1309 = scmp.le.s32.totalorder 2, %s20
    // Predicated region
    $region81: #{transformer_encoder.5} parent=5 // pred_check
      %p1310 = pneg %p1309
    $region82: #{transformer_encoder.5} parent=5 // pred_check_branch
      %1312 = sbr.rel (%p1310) target = $region84
    $region83: #{transformer_encoder.5} parent=5 // pred_region
      %s1313 = ssub.s32 %s20, 2
      // Predicated region
      $region85: #{transformer_encoder.5} parent=83 // pred_check
        %p1314 = pneg %p381
      $region86: #{transformer_encoder.5} parent=83 // pred_check_branch
        %1316 = sbr.rel (%p1314) target = $region88
      $region87: #{transformer_encoder.5} parent=83 // pred_region
        %p1317 = scmp.lt.s32.totalorder %s31, 1
        %s1318 = scalar_select %p1317, %s31, 1
        %p1319 = scmp.lt.s32.totalorder %s32, 0
        %s1320 = scalar_select %p1319, %s32, 0
        %s1321 = sadd.s32 %s1320, %s1318
        %s1322 = smul.addr %s1321, 8
        %s1323 = scalar_lea.vmem %s14, %s1322
      $region88: #{transformer_encoder.5} parent=83 // pred_fallthru
        _
    $region84: #{transformer_encoder.5} parent=5 // pred_fallthru
      _
  $region6: #{transformer_encoder.5} parent=0 // loop_footer
    %s24 = sadd.s32 1, %s20
  $region7: #{transformer_encoder.5} parent=0 // loop_footer_branch
    %19 = sbr.rel target = $region3
  $region8: #{transformer_encoder.5} parent=0 // loop_exit
    _

</llo_original>
